<compile_context>
chip_gen: v7x
topology: tpu7x:2x2x1
jax: 0.10.0
libtpu: 0.0.40
codegen_flags: <defaults>
</compile_context>

<pallas_src>
import functools

import jax
import jax.numpy as jnp
from jax.experimental import pallas as pl
from jax.experimental.pallas import tpu as pltpu


def _round_up(x, m):
    return ((x + m - 1) // m) * m


def _cdiv(a, b):
    return -(-a // b)


def _make_kernel(layer_shapes, rows_tile):
    """layer_shapes: tuple of (c_out, c_in) per layer.
    rows_tile: rows of 128 pixels per grid step (multiple of 8, or the full
    row count when the image is smaller than one tile)."""
    n_full, rem = divmod(rows_tile, 8)
    c_in0 = layer_shapes[0][1]

    def kernel(alphas_ref, x_ref, *rest):
        # rest = (w1, b1, ..., wn, bn, o_ref); weights (Cout, Cin) and biases
        # (Cout,) live in SMEM; x/o tiles are (1, C, rows_tile, 128) in VMEM.
        wb_refs, o_ref = rest[:-1], rest[-1]

        def process_chunk(row0, nrows):
            # One (nrows<=8, 128) vreg per input channel; the whole chain is
            # register resident and only the final channels are stored.
            h = [x_ref[0, ci, pl.ds(row0, nrows), :].astype(jnp.float32)
                 for ci in range(c_in0)]
            for li, (c_out, c_in) in enumerate(layer_shapes):
                w_ref = wb_refs[2 * li]        # (c_out, c_in) scalars in SMEM
                b_ref = wb_refs[2 * li + 1]    # (c_out,)      scalars in SMEM
                a = alphas_ref[li]             # scalar PReLU slope
                nxt = []
                for co in range(c_out):
                    acc = h[0] * w_ref[co, 0] + b_ref[co]
                    for ci in range(1, c_in):
                        acc = acc + h[ci] * w_ref[co, ci]
                    nxt.append(jnp.where(acc > 0, acc, a * acc))
                h = nxt
            for co, val in enumerate(h):
                o_ref[0, co, pl.ds(row0, nrows), :] = val.astype(o_ref.dtype)

        # Static chunk walk: offsets are compile-time constants and each chunk's
        # values die before the next chunk, so the live vreg set stays small.
        for c in range(n_full):
            process_chunk(c * 8, 8)
        if rem:
            process_chunk(n_full * 8, rem)

    return kernel


@functools.partial(jax.jit, static_argnames=("pixel_tile",))
def pixelwise_linear(x, weights, biases, alphas, *, pixel_tile=16384):
    """x: NCHW array. weights[i]: (Cout_i, Cin_i) (PyTorch 1x1 conv weight
    squeezed). biases[i]: (Cout_i,). alphas: (n_layers,) PReLU slopes."""
    N, C, H, W = x.shape
    n_layers = len(weights)
    assert len(biases) == n_layers
    c_out = weights[-1].shape[0]
    HW = H * W

    # Fold pixels into lane-dense rows of 128: (N, C, HW) -> (N, C, R, 128).
    # Free reshape unless HW is ragged (then a one-off pad of the pixel axis).
    HW_pad = _round_up(HW, 128)
    R = HW_pad // 128
    xm = x.reshape(N, C, HW)
    if HW_pad != HW:
        xm = jnp.pad(xm, ((0, 0), (0, 0), (0, HW_pad - HW)))
    xm = xm.reshape(N, C, R, 128)

    # Rows of 128 pixels per grid step: large tile amortizes per-step overhead;
    # multiple of 8 so in-kernel chunks are full (8, 128) vregs.
    rows_target = max(8, _round_up(pixel_tile, 1024) // 128)
    rows_tile = R if R <= rows_target else rows_target
    n_row_tiles = _cdiv(R, rows_tile)
    # Guarantee >= 2 grid steps when possible so both v7x TensorCores get work.
    if N * n_row_tiles < 2 and R >= 16:
        rows_tile = _round_up(_cdiv(R, 2), 8)
        n_row_tiles = _cdiv(R, rows_tile)

    grid = (N, n_row_tiles)

    # Tiny parameter tensors -> SMEM scalars (f32).
    wts = [jnp.asarray(w, jnp.float32) for w in weights]
    bss = [jnp.asarray(b, jnp.float32).reshape(-1) for b in biases]
    al = jnp.asarray(alphas, jnp.float32).reshape(-1)

    smem = pl.BlockSpec(memory_space=pltpu.SMEM)
    in_specs = [smem,                                                   # alphas
                pl.BlockSpec((1, C, rows_tile, 128),
                             lambda n, p: (n, 0, p, 0))]                # x tile
    for _ in range(n_layers):
        in_specs += [smem, smem]                                        # w, b
    out_specs = pl.BlockSpec((1, c_out, rows_tile, 128),
                             lambda n, p: (n, 0, p, 0))

    layer_shapes = tuple((int(w.shape[0]), int(w.shape[1])) for w in wts)

    flops = 2 * N * HW * sum(co * ci for co, ci in layer_shapes)
    bytes_accessed = (N * HW * (C + c_out) * x.dtype.itemsize
                      + 4 * sum(int(w.size) for w in wts)
                      + 4 * sum(int(b.size) for b in bss))

    out = pl.pallas_call(
        _make_kernel(layer_shapes, rows_tile),
        out_shape=jax.ShapeDtypeStruct((N, c_out, R, 128), x.dtype),
        grid=grid,
        in_specs=in_specs,
        out_specs=out_specs,
        compiler_params=pltpu.CompilerParams(
            dimension_semantics=("parallel", "parallel")),
        cost_estimate=pl.CostEstimate(
            flops=flops, transcendentals=0, bytes_accessed=bytes_accessed),
    )(al, xm, *[t for pair in zip(wts, bss) for t in pair])

    if HW_pad != HW:
        out = out.reshape(N, c_out, HW_pad)[:, :, :HW]
    return out.reshape(N, c_out, H, W)


def _reference(x, weights, biases, alphas):
    # Pure-JAX reference of the PyTorch forward (1x1 conv + bias + PReLU chain).
    N, C, H, W = x.shape
    h = jnp.transpose(x, (0, 2, 3, 1)).reshape(-1, C).astype(jnp.float32)
    for w, b, a in zip(weights, biases, alphas):
        y = h @ jnp.transpose(w).astype(jnp.float32) + b.astype(jnp.float32)
        h = jnp.where(y > 0, y, a * y)
    co = weights[-1].shape[0]
    return jnp.transpose(h.reshape(N, H, W, co), (0, 3, 1, 2)).astype(x.dtype)


if __name__ == "__main__":
    # PixelwiseLinear(fin=[4, 8, 8], fout=[8, 8, 1], last_activation=None)
    fin = [4, 8, 8]
    fout = [8, 8, 1]
    n_layers = len(fin)

    key = jax.random.PRNGKey(0)
    keys = jax.random.split(key, 2 * n_layers + 1)

    weights = []
    biases = []
    for i in range(n_layers):
        # Deterministic synthetic init (shapes match Conv2d(fin, fout, 1)).
        w = 0.1 * jax.random.normal(keys[2 * i], (fout[i], fin[i]), jnp.float32)
        b = 0.1 * jax.random.normal(keys[2 * i + 1], (fout[i],), jnp.float32)
        weights.append(w)
        biases.append(b)
    # nn.PReLU() default: single parameter initialized to 0.25 per layer.
    alphas = jnp.full((n_layers,), 0.25, dtype=jnp.float32)

    x = jax.random.normal(keys[-1], (2, fin[0], 16, 16), jnp.float32)

    out = pixelwise_linear(x, weights, biases, alphas)
    out = jax.block_until_ready(out)

    ref = _reference(x, weights, biases, alphas)
    assert out.shape == (2, fout[-1], 16, 16)
    assert jnp.allclose(out, ref, atol=1e-5, rtol=1e-5)

    print("KERNEL_OK")
</pallas_src>

<mosaic_0001>
module attributes {stable_mosaic.version = 11 : i64} {
  func.func @kernel(%arg0: i32, %arg1: i32, %arg2: memref<3xf32, #tpu.memory_space<smem>>, %arg3: memref<1x4x2x128xf32, #tpu.memory_space<vmem>>, %arg4: memref<8x4xf32, #tpu.memory_space<smem>>, %arg5: memref<8xf32, #tpu.memory_space<smem>>, %arg6: memref<8x8xf32, #tpu.memory_space<smem>>, %arg7: memref<8xf32, #tpu.memory_space<smem>>, %arg8: memref<1x8xf32, #tpu.memory_space<smem>>, %arg9: memref<1xf32, #tpu.memory_space<smem>>, %arg10: memref<1x1x2x128xf32, #tpu.memory_space<vmem>>) attributes {dimension_semantics = [#tpu.dimension_semantics<parallel>, #tpu.dimension_semantics<parallel>], iteration_bounds = array<i64: 2, 1>, scalar_prefetch = 0 : i64, scratch_operands = 0 : i64, tpu.core_type = #tpu.core_type<tc>, window_params = [{transform_indices = @transform_0, window_bounds = array<i64: 3>}, {transform_indices = @transform_1, window_bounds = array<i64: 1, 4, 2, 128>}, {transform_indices = @transform_2, window_bounds = array<i64: 8, 4>}, {transform_indices = @transform_3, window_bounds = array<i64: 8>}, {transform_indices = @transform_4, window_bounds = array<i64: 8, 8>}, {transform_indices = @transform_5, window_bounds = array<i64: 8>}, {transform_indices = @transform_6, window_bounds = array<i64: 1, 8>}, {transform_indices = @transform_7, window_bounds = array<i64: 1>}, {transform_indices = @transform_8, window_bounds = array<i64: 1, 1, 2, 128>}]} {
    %c0 = arith.constant 0 : index
    %c0_0 = arith.constant 0 : index
    %c0_1 = arith.constant 0 : index
    %c0_2 = arith.constant 0 : index
    %0 = vector.load %arg3[%c0, %c0_0, %c0_1, %c0_2] : memref<1x4x2x128xf32, #tpu.memory_space<vmem>>, vector<1x1x2x128xf32>
    %1 = vector.shape_cast %0 : vector<1x1x2x128xf32> to vector<2x128xf32>
    %c0_3 = arith.constant 0 : index
    %c1 = arith.constant 1 : index
    %c0_4 = arith.constant 0 : index
    %c0_5 = arith.constant 0 : index
    %2 = vector.load %arg3[%c0_3, %c1, %c0_4, %c0_5] : memref<1x4x2x128xf32, #tpu.memory_space<vmem>>, vector<1x1x2x128xf32>
    %3 = vector.shape_cast %2 : vector<1x1x2x128xf32> to vector<2x128xf32>
    %c0_6 = arith.constant 0 : index
    %c2 = arith.constant 2 : index
    %c0_7 = arith.constant 0 : index
    %c0_8 = arith.constant 0 : index
    %4 = vector.load %arg3[%c0_6, %c2, %c0_7, %c0_8] : memref<1x4x2x128xf32, #tpu.memory_space<vmem>>, vector<1x1x2x128xf32>
    %5 = vector.shape_cast %4 : vector<1x1x2x128xf32> to vector<2x128xf32>
    %c0_9 = arith.constant 0 : index
    %c3 = arith.constant 3 : index
    %c0_10 = arith.constant 0 : index
    %c0_11 = arith.constant 0 : index
    %6 = vector.load %arg3[%c0_9, %c3, %c0_10, %c0_11] : memref<1x4x2x128xf32, #tpu.memory_space<vmem>>, vector<1x1x2x128xf32>
    %7 = vector.shape_cast %6 : vector<1x1x2x128xf32> to vector<2x128xf32>
    %c0_12 = arith.constant 0 : index
    %8 = memref.load %arg2[%c0_12] : memref<3xf32, #tpu.memory_space<smem>>
    %c0_13 = arith.constant 0 : index
    %c0_14 = arith.constant 0 : index
    %9 = memref.load %arg4[%c0_13, %c0_14] : memref<8x4xf32, #tpu.memory_space<smem>>
    %10 = vector.broadcast %9 : f32 to vector<2x128xf32>
    %11 = arith.mulf %1, %10 : vector<2x128xf32>
    %c0_15 = arith.constant 0 : index
    %12 = memref.load %arg5[%c0_15] : memref<8xf32, #tpu.memory_space<smem>>
    %13 = vector.broadcast %12 : f32 to vector<2x128xf32>
    %14 = arith.addf %11, %13 : vector<2x128xf32>
    %c0_16 = arith.constant 0 : index
    %c1_17 = arith.constant 1 : index
    %15 = memref.load %arg4[%c0_16, %c1_17] : memref<8x4xf32, #tpu.memory_space<smem>>
    %16 = vector.broadcast %15 : f32 to vector<2x128xf32>
    %17 = arith.mulf %3, %16 : vector<2x128xf32>
    %18 = arith.addf %14, %17 : vector<2x128xf32>
    %c0_18 = arith.constant 0 : index
    %c2_19 = arith.constant 2 : index
    %19 = memref.load %arg4[%c0_18, %c2_19] : memref<8x4xf32, #tpu.memory_space<smem>>
    %20 = vector.broadcast %19 : f32 to vector<2x128xf32>
    %21 = arith.mulf %5, %20 : vector<2x128xf32>
    %22 = arith.addf %18, %21 : vector<2x128xf32>
    %c0_20 = arith.constant 0 : index
    %c3_21 = arith.constant 3 : index
    %23 = memref.load %arg4[%c0_20, %c3_21] : memref<8x4xf32, #tpu.memory_space<smem>>
    %24 = vector.broadcast %23 : f32 to vector<2x128xf32>
    %25 = arith.mulf %7, %24 : vector<2x128xf32>
    %26 = arith.addf %22, %25 : vector<2x128xf32>
    %cst = arith.constant 0.000000e+00 : f32
    %27 = vector.broadcast %cst : f32 to vector<2x128xf32>
    %28 = arith.cmpf ogt, %26, %27 : vector<2x128xf32>
    %29 = vector.broadcast %8 : f32 to vector<2x128xf32>
    %30 = arith.mulf %29, %26 : vector<2x128xf32>
    %31 = arith.select %28, %26, %30 : vector<2x128xi1>, vector<2x128xf32>
    %c1_22 = arith.constant 1 : index
    %c0_23 = arith.constant 0 : index
    %32 = memref.load %arg4[%c1_22, %c0_23] : memref<8x4xf32, #tpu.memory_space<smem>>
    %33 = vector.broadcast %32 : f32 to vector<2x128xf32>
    %34 = arith.mulf %1, %33 : vector<2x128xf32>
    %c1_24 = arith.constant 1 : index
    %35 = memref.load %arg5[%c1_24] : memref<8xf32, #tpu.memory_space<smem>>
    %36 = vector.broadcast %35 : f32 to vector<2x128xf32>
    %37 = arith.addf %34, %36 : vector<2x128xf32>
    %c1_25 = arith.constant 1 : index
    %c1_26 = arith.constant 1 : index
    %38 = memref.load %arg4[%c1_25, %c1_26] : memref<8x4xf32, #tpu.memory_space<smem>>
    %39 = vector.broadcast %38 : f32 to vector<2x128xf32>
    %40 = arith.mulf %3, %39 : vector<2x128xf32>
    %41 = arith.addf %37, %40 : vector<2x128xf32>
    %c1_27 = arith.constant 1 : index
    %c2_28 = arith.constant 2 : index
    %42 = memref.load %arg4[%c1_27, %c2_28] : memref<8x4xf32, #tpu.memory_space<smem>>
    %43 = vector.broadcast %42 : f32 to vector<2x128xf32>
    %44 = arith.mulf %5, %43 : vector<2x128xf32>
    %45 = arith.addf %41, %44 : vector<2x128xf32>
    %c1_29 = arith.constant 1 : index
    %c3_30 = arith.constant 3 : index
    %46 = memref.load %arg4[%c1_29, %c3_30] : memref<8x4xf32, #tpu.memory_space<smem>>
    %47 = vector.broadcast %46 : f32 to vector<2x128xf32>
    %48 = arith.mulf %7, %47 : vector<2x128xf32>
    %49 = arith.addf %45, %48 : vector<2x128xf32>
    %cst_31 = arith.constant 0.000000e+00 : f32
    %50 = vector.broadcast %cst_31 : f32 to vector<2x128xf32>
    %51 = arith.cmpf ogt, %49, %50 : vector<2x128xf32>
    %52 = vector.broadcast %8 : f32 to vector<2x128xf32>
    %53 = arith.mulf %52, %49 : vector<2x128xf32>
    %54 = arith.select %51, %49, %53 : vector<2x128xi1>, vector<2x128xf32>
    %c2_32 = arith.constant 2 : index
    %c0_33 = arith.constant 0 : index
    %55 = memref.load %arg4[%c2_32, %c0_33] : memref<8x4xf32, #tpu.memory_space<smem>>
    %56 = vector.broadcast %55 : f32 to vector<2x128xf32>
    %57 = arith.mulf %1, %56 : vector<2x128xf32>
    %c2_34 = arith.constant 2 : index
    %58 = memref.load %arg5[%c2_34] : memref<8xf32, #tpu.memory_space<smem>>
    %59 = vector.broadcast %58 : f32 to vector<2x128xf32>
    %60 = arith.addf %57, %59 : vector<2x128xf32>
    %c2_35 = arith.constant 2 : index
    %c1_36 = arith.constant 1 : index
    %61 = memref.load %arg4[%c2_35, %c1_36] : memref<8x4xf32, #tpu.memory_space<smem>>
    %62 = vector.broadcast %61 : f32 to vector<2x128xf32>
    %63 = arith.mulf %3, %62 : vector<2x128xf32>
    %64 = arith.addf %60, %63 : vector<2x128xf32>
    %c2_37 = arith.constant 2 : index
    %c2_38 = arith.constant 2 : index
    %65 = memref.load %arg4[%c2_37, %c2_38] : memref<8x4xf32, #tpu.memory_space<smem>>
    %66 = vector.broadcast %65 : f32 to vector<2x128xf32>
    %67 = arith.mulf %5, %66 : vector<2x128xf32>
    %68 = arith.addf %64, %67 : vector<2x128xf32>
    %c2_39 = arith.constant 2 : index
    %c3_40 = arith.constant 3 : index
    %69 = memref.load %arg4[%c2_39, %c3_40] : memref<8x4xf32, #tpu.memory_space<smem>>
    %70 = vector.broadcast %69 : f32 to vector<2x128xf32>
    %71 = arith.mulf %7, %70 : vector<2x128xf32>
    %72 = arith.addf %68, %71 : vector<2x128xf32>
    %cst_41 = arith.constant 0.000000e+00 : f32
    %73 = vector.broadcast %cst_41 : f32 to vector<2x128xf32>
    %74 = arith.cmpf ogt, %72, %73 : vector<2x128xf32>
    %75 = vector.broadcast %8 : f32 to vector<2x128xf32>
    %76 = arith.mulf %75, %72 : vector<2x128xf32>
    %77 = arith.select %74, %72, %76 : vector<2x128xi1>, vector<2x128xf32>
    %c3_42 = arith.constant 3 : index
    %c0_43 = arith.constant 0 : index
    %78 = memref.load %arg4[%c3_42, %c0_43] : memref<8x4xf32, #tpu.memory_space<smem>>
    %79 = vector.broadcast %78 : f32 to vector<2x128xf32>
    %80 = arith.mulf %1, %79 : vector<2x128xf32>
    %c3_44 = arith.constant 3 : index
    %81 = memref.load %arg5[%c3_44] : memref<8xf32, #tpu.memory_space<smem>>
    %82 = vector.broadcast %81 : f32 to vector<2x128xf32>
    %83 = arith.addf %80, %82 : vector<2x128xf32>
    %c3_45 = arith.constant 3 : index
    %c1_46 = arith.constant 1 : index
    %84 = memref.load %arg4[%c3_45, %c1_46] : memref<8x4xf32, #tpu.memory_space<smem>>
    %85 = vector.broadcast %84 : f32 to vector<2x128xf32>
    %86 = arith.mulf %3, %85 : vector<2x128xf32>
    %87 = arith.addf %83, %86 : vector<2x128xf32>
    %c3_47 = arith.constant 3 : index
    %c2_48 = arith.constant 2 : index
    %88 = memref.load %arg4[%c3_47, %c2_48] : memref<8x4xf32, #tpu.memory_space<smem>>
    %89 = vector.broadcast %88 : f32 to vector<2x128xf32>
    %90 = arith.mulf %5, %89 : vector<2x128xf32>
    %91 = arith.addf %87, %90 : vector<2x128xf32>
    %c3_49 = arith.constant 3 : index
    %c3_50 = arith.constant 3 : index
    %92 = memref.load %arg4[%c3_49, %c3_50] : memref<8x4xf32, #tpu.memory_space<smem>>
    %93 = vector.broadcast %92 : f32 to vector<2x128xf32>
    %94 = arith.mulf %7, %93 : vector<2x128xf32>
    %95 = arith.addf %91, %94 : vector<2x128xf32>
    %cst_51 = arith.constant 0.000000e+00 : f32
    %96 = vector.broadcast %cst_51 : f32 to vector<2x128xf32>
    %97 = arith.cmpf ogt, %95, %96 : vector<2x128xf32>
    %98 = vector.broadcast %8 : f32 to vector<2x128xf32>
    %99 = arith.mulf %98, %95 : vector<2x128xf32>
    %100 = arith.select %97, %95, %99 : vector<2x128xi1>, vector<2x128xf32>
    %c4 = arith.constant 4 : index
    %c0_52 = arith.constant 0 : index
    %101 = memref.load %arg4[%c4, %c0_52] : memref<8x4xf32, #tpu.memory_space<smem>>
    %102 = vector.broadcast %101 : f32 to vector<2x128xf32>
    %103 = arith.mulf %1, %102 : vector<2x128xf32>
    %c4_53 = arith.constant 4 : index
    %104 = memref.load %arg5[%c4_53] : memref<8xf32, #tpu.memory_space<smem>>
    %105 = vector.broadcast %104 : f32 to vector<2x128xf32>
    %106 = arith.addf %103, %105 : vector<2x128xf32>
    %c4_54 = arith.constant 4 : index
    %c1_55 = arith.constant 1 : index
    %107 = memref.load %arg4[%c4_54, %c1_55] : memref<8x4xf32, #tpu.memory_space<smem>>
    %108 = vector.broadcast %107 : f32 to vector<2x128xf32>
    %109 = arith.mulf %3, %108 : vector<2x128xf32>
    %110 = arith.addf %106, %109 : vector<2x128xf32>
    %c4_56 = arith.constant 4 : index
    %c2_57 = arith.constant 2 : index
    %111 = memref.load %arg4[%c4_56, %c2_57] : memref<8x4xf32, #tpu.memory_space<smem>>
    %112 = vector.broadcast %111 : f32 to vector<2x128xf32>
    %113 = arith.mulf %5, %112 : vector<2x128xf32>
    %114 = arith.addf %110, %113 : vector<2x128xf32>
    %c4_58 = arith.constant 4 : index
    %c3_59 = arith.constant 3 : index
    %115 = memref.load %arg4[%c4_58, %c3_59] : memref<8x4xf32, #tpu.memory_space<smem>>
    %116 = vector.broadcast %115 : f32 to vector<2x128xf32>
    %117 = arith.mulf %7, %116 : vector<2x128xf32>
    %118 = arith.addf %114, %117 : vector<2x128xf32>
    %cst_60 = arith.constant 0.000000e+00 : f32
    %119 = vector.broadcast %cst_60 : f32 to vector<2x128xf32>
    %120 = arith.cmpf ogt, %118, %119 : vector<2x128xf32>
    %121 = vector.broadcast %8 : f32 to vector<2x128xf32>
    %122 = arith.mulf %121, %118 : vector<2x128xf32>
    %123 = arith.select %120, %118, %122 : vector<2x128xi1>, vector<2x128xf32>
    %c5 = arith.constant 5 : index
    %c0_61 = arith.constant 0 : index
    %124 = memref.load %arg4[%c5, %c0_61] : memref<8x4xf32, #tpu.memory_space<smem>>
    %125 = vector.broadcast %124 : f32 to vector<2x128xf32>
    %126 = arith.mulf %1, %125 : vector<2x128xf32>
    %c5_62 = arith.constant 5 : index
    %127 = memref.load %arg5[%c5_62] : memref<8xf32, #tpu.memory_space<smem>>
    %128 = vector.broadcast %127 : f32 to vector<2x128xf32>
    %129 = arith.addf %126, %128 : vector<2x128xf32>
    %c5_63 = arith.constant 5 : index
    %c1_64 = arith.constant 1 : index
    %130 = memref.load %arg4[%c5_63, %c1_64] : memref<8x4xf32, #tpu.memory_space<smem>>
    %131 = vector.broadcast %130 : f32 to vector<2x128xf32>
    %132 = arith.mulf %3, %131 : vector<2x128xf32>
    %133 = arith.addf %129, %132 : vector<2x128xf32>
    %c5_65 = arith.constant 5 : index
    %c2_66 = arith.constant 2 : index
    %134 = memref.load %arg4[%c5_65, %c2_66] : memref<8x4xf32, #tpu.memory_space<smem>>
    %135 = vector.broadcast %134 : f32 to vector<2x128xf32>
    %136 = arith.mulf %5, %135 : vector<2x128xf32>
    %137 = arith.addf %133, %136 : vector<2x128xf32>
    %c5_67 = arith.constant 5 : index
    %c3_68 = arith.constant 3 : index
    %138 = memref.load %arg4[%c5_67, %c3_68] : memref<8x4xf32, #tpu.memory_space<smem>>
    %139 = vector.broadcast %138 : f32 to vector<2x128xf32>
    %140 = arith.mulf %7, %139 : vector<2x128xf32>
    %141 = arith.addf %137, %140 : vector<2x128xf32>
    %cst_69 = arith.constant 0.000000e+00 : f32
    %142 = vector.broadcast %cst_69 : f32 to vector<2x128xf32>
    %143 = arith.cmpf ogt, %141, %142 : vector<2x128xf32>
    %144 = vector.broadcast %8 : f32 to vector<2x128xf32>
    %145 = arith.mulf %144, %141 : vector<2x128xf32>
    %146 = arith.select %143, %141, %145 : vector<2x128xi1>, vector<2x128xf32>
    %c6 = arith.constant 6 : index
    %c0_70 = arith.constant 0 : index
    %147 = memref.load %arg4[%c6, %c0_70] : memref<8x4xf32, #tpu.memory_space<smem>>
    %148 = vector.broadcast %147 : f32 to vector<2x128xf32>
    %149 = arith.mulf %1, %148 : vector<2x128xf32>
    %c6_71 = arith.constant 6 : index
    %150 = memref.load %arg5[%c6_71] : memref<8xf32, #tpu.memory_space<smem>>
    %151 = vector.broadcast %150 : f32 to vector<2x128xf32>
    %152 = arith.addf %149, %151 : vector<2x128xf32>
    %c6_72 = arith.constant 6 : index
    %c1_73 = arith.constant 1 : index
    %153 = memref.load %arg4[%c6_72, %c1_73] : memref<8x4xf32, #tpu.memory_space<smem>>
    %154 = vector.broadcast %153 : f32 to vector<2x128xf32>
    %155 = arith.mulf %3, %154 : vector<2x128xf32>
    %156 = arith.addf %152, %155 : vector<2x128xf32>
    %c6_74 = arith.constant 6 : index
    %c2_75 = arith.constant 2 : index
    %157 = memref.load %arg4[%c6_74, %c2_75] : memref<8x4xf32, #tpu.memory_space<smem>>
    %158 = vector.broadcast %157 : f32 to vector<2x128xf32>
    %159 = arith.mulf %5, %158 : vector<2x128xf32>
    %160 = arith.addf %156, %159 : vector<2x128xf32>
    %c6_76 = arith.constant 6 : index
    %c3_77 = arith.constant 3 : index
    %161 = memref.load %arg4[%c6_76, %c3_77] : memref<8x4xf32, #tpu.memory_space<smem>>
    %162 = vector.broadcast %161 : f32 to vector<2x128xf32>
    %163 = arith.mulf %7, %162 : vector<2x128xf32>
    %164 = arith.addf %160, %163 : vector<2x128xf32>
    %cst_78 = arith.constant 0.000000e+00 : f32
    %165 = vector.broadcast %cst_78 : f32 to vector<2x128xf32>
    %166 = arith.cmpf ogt, %164, %165 : vector<2x128xf32>
    %167 = vector.broadcast %8 : f32 to vector<2x128xf32>
    %168 = arith.mulf %167, %164 : vector<2x128xf32>
    %169 = arith.select %166, %164, %168 : vector<2x128xi1>, vector<2x128xf32>
    %c7 = arith.constant 7 : index
    %c0_79 = arith.constant 0 : index
    %170 = memref.load %arg4[%c7, %c0_79] : memref<8x4xf32, #tpu.memory_space<smem>>
    %171 = vector.broadcast %170 : f32 to vector<2x128xf32>
    %172 = arith.mulf %1, %171 : vector<2x128xf32>
    %c7_80 = arith.constant 7 : index
    %173 = memref.load %arg5[%c7_80] : memref<8xf32, #tpu.memory_space<smem>>
    %174 = vector.broadcast %173 : f32 to vector<2x128xf32>
    %175 = arith.addf %172, %174 : vector<2x128xf32>
    %c7_81 = arith.constant 7 : index
    %c1_82 = arith.constant 1 : index
    %176 = memref.load %arg4[%c7_81, %c1_82] : memref<8x4xf32, #tpu.memory_space<smem>>
    %177 = vector.broadcast %176 : f32 to vector<2x128xf32>
    %178 = arith.mulf %3, %177 : vector<2x128xf32>
    %179 = arith.addf %175, %178 : vector<2x128xf32>
    %c7_83 = arith.constant 7 : index
    %c2_84 = arith.constant 2 : index
    %180 = memref.load %arg4[%c7_83, %c2_84] : memref<8x4xf32, #tpu.memory_space<smem>>
    %181 = vector.broadcast %180 : f32 to vector<2x128xf32>
    %182 = arith.mulf %5, %181 : vector<2x128xf32>
    %183 = arith.addf %179, %182 : vector<2x128xf32>
    %c7_85 = arith.constant 7 : index
    %c3_86 = arith.constant 3 : index
    %184 = memref.load %arg4[%c7_85, %c3_86] : memref<8x4xf32, #tpu.memory_space<smem>>
    %185 = vector.broadcast %184 : f32 to vector<2x128xf32>
    %186 = arith.mulf %7, %185 : vector<2x128xf32>
    %187 = arith.addf %183, %186 : vector<2x128xf32>
    %cst_87 = arith.constant 0.000000e+00 : f32
    %188 = vector.broadcast %cst_87 : f32 to vector<2x128xf32>
    %189 = arith.cmpf ogt, %187, %188 : vector<2x128xf32>
    %190 = vector.broadcast %8 : f32 to vector<2x128xf32>
    %191 = arith.mulf %190, %187 : vector<2x128xf32>
    %192 = arith.select %189, %187, %191 : vector<2x128xi1>, vector<2x128xf32>
    %c1_88 = arith.constant 1 : index
    %193 = memref.load %arg2[%c1_88] : memref<3xf32, #tpu.memory_space<smem>>
    %c0_89 = arith.constant 0 : index
    %c0_90 = arith.constant 0 : index
    %194 = memref.load %arg6[%c0_89, %c0_90] : memref<8x8xf32, #tpu.memory_space<smem>>
    %195 = vector.broadcast %194 : f32 to vector<2x128xf32>
    %196 = arith.mulf %31, %195 : vector<2x128xf32>
    %c0_91 = arith.constant 0 : index
    %197 = memref.load %arg7[%c0_91] : memref<8xf32, #tpu.memory_space<smem>>
    %198 = vector.broadcast %197 : f32 to vector<2x128xf32>
    %199 = arith.addf %196, %198 : vector<2x128xf32>
    %c0_92 = arith.constant 0 : index
    %c1_93 = arith.constant 1 : index
    %200 = memref.load %arg6[%c0_92, %c1_93] : memref<8x8xf32, #tpu.memory_space<smem>>
    %201 = vector.broadcast %200 : f32 to vector<2x128xf32>
    %202 = arith.mulf %54, %201 : vector<2x128xf32>
    %203 = arith.addf %199, %202 : vector<2x128xf32>
    %c0_94 = arith.constant 0 : index
    %c2_95 = arith.constant 2 : index
    %204 = memref.load %arg6[%c0_94, %c2_95] : memref<8x8xf32, #tpu.memory_space<smem>>
    %205 = vector.broadcast %204 : f32 to vector<2x128xf32>
    %206 = arith.mulf %77, %205 : vector<2x128xf32>
    %207 = arith.addf %203, %206 : vector<2x128xf32>
    %c0_96 = arith.constant 0 : index
    %c3_97 = arith.constant 3 : index
    %208 = memref.load %arg6[%c0_96, %c3_97] : memref<8x8xf32, #tpu.memory_space<smem>>
    %209 = vector.broadcast %208 : f32 to vector<2x128xf32>
    %210 = arith.mulf %100, %209 : vector<2x128xf32>
    %211 = arith.addf %207, %210 : vector<2x128xf32>
    %c0_98 = arith.constant 0 : index
    %c4_99 = arith.constant 4 : index
    %212 = memref.load %arg6[%c0_98, %c4_99] : memref<8x8xf32, #tpu.memory_space<smem>>
    %213 = vector.broadcast %212 : f32 to vector<2x128xf32>
    %214 = arith.mulf %123, %213 : vector<2x128xf32>
    %215 = arith.addf %211, %214 : vector<2x128xf32>
    %c0_100 = arith.constant 0 : index
    %c5_101 = arith.constant 5 : index
    %216 = memref.load %arg6[%c0_100, %c5_101] : memref<8x8xf32, #tpu.memory_space<smem>>
    %217 = vector.broadcast %216 : f32 to vector<2x128xf32>
    %218 = arith.mulf %146, %217 : vector<2x128xf32>
    %219 = arith.addf %215, %218 : vector<2x128xf32>
    %c0_102 = arith.constant 0 : index
    %c6_103 = arith.constant 6 : index
    %220 = memref.load %arg6[%c0_102, %c6_103] : memref<8x8xf32, #tpu.memory_space<smem>>
    %221 = vector.broadcast %220 : f32 to vector<2x128xf32>
    %222 = arith.mulf %169, %221 : vector<2x128xf32>
    %223 = arith.addf %219, %222 : vector<2x128xf32>
    %c0_104 = arith.constant 0 : index
    %c7_105 = arith.constant 7 : index
    %224 = memref.load %arg6[%c0_104, %c7_105] : memref<8x8xf32, #tpu.memory_space<smem>>
    %225 = vector.broadcast %224 : f32 to vector<2x128xf32>
    %226 = arith.mulf %192, %225 : vector<2x128xf32>
    %227 = arith.addf %223, %226 : vector<2x128xf32>
    %cst_106 = arith.constant 0.000000e+00 : f32
    %228 = vector.broadcast %cst_106 : f32 to vector<2x128xf32>
    %229 = arith.cmpf ogt, %227, %228 : vector<2x128xf32>
    %230 = vector.broadcast %193 : f32 to vector<2x128xf32>
    %231 = arith.mulf %230, %227 : vector<2x128xf32>
    %232 = arith.select %229, %227, %231 : vector<2x128xi1>, vector<2x128xf32>
    %c1_107 = arith.constant 1 : index
    %c0_108 = arith.constant 0 : index
    %233 = memref.load %arg6[%c1_107, %c0_108] : memref<8x8xf32, #tpu.memory_space<smem>>
    %234 = vector.broadcast %233 : f32 to vector<2x128xf32>
    %235 = arith.mulf %31, %234 : vector<2x128xf32>
    %c1_109 = arith.constant 1 : index
    %236 = memref.load %arg7[%c1_109] : memref<8xf32, #tpu.memory_space<smem>>
    %237 = vector.broadcast %236 : f32 to vector<2x128xf32>
    %238 = arith.addf %235, %237 : vector<2x128xf32>
    %c1_110 = arith.constant 1 : index
    %c1_111 = arith.constant 1 : index
    %239 = memref.load %arg6[%c1_110, %c1_111] : memref<8x8xf32, #tpu.memory_space<smem>>
    %240 = vector.broadcast %239 : f32 to vector<2x128xf32>
    %241 = arith.mulf %54, %240 : vector<2x128xf32>
    %242 = arith.addf %238, %241 : vector<2x128xf32>
    %c1_112 = arith.constant 1 : index
    %c2_113 = arith.constant 2 : index
    %243 = memref.load %arg6[%c1_112, %c2_113] : memref<8x8xf32, #tpu.memory_space<smem>>
    %244 = vector.broadcast %243 : f32 to vector<2x128xf32>
    %245 = arith.mulf %77, %244 : vector<2x128xf32>
    %246 = arith.addf %242, %245 : vector<2x128xf32>
    %c1_114 = arith.constant 1 : index
    %c3_115 = arith.constant 3 : index
    %247 = memref.load %arg6[%c1_114, %c3_115] : memref<8x8xf32, #tpu.memory_space<smem>>
    %248 = vector.broadcast %247 : f32 to vector<2x128xf32>
    %249 = arith.mulf %100, %248 : vector<2x128xf32>
    %250 = arith.addf %246, %249 : vector<2x128xf32>
    %c1_116 = arith.constant 1 : index
    %c4_117 = arith.constant 4 : index
    %251 = memref.load %arg6[%c1_116, %c4_117] : memref<8x8xf32, #tpu.memory_space<smem>>
    %252 = vector.broadcast %251 : f32 to vector<2x128xf32>
    %253 = arith.mulf %123, %252 : vector<2x128xf32>
    %254 = arith.addf %250, %253 : vector<2x128xf32>
    %c1_118 = arith.constant 1 : index
    %c5_119 = arith.constant 5 : index
    %255 = memref.load %arg6[%c1_118, %c5_119] : memref<8x8xf32, #tpu.memory_space<smem>>
    %256 = vector.broadcast %255 : f32 to vector<2x128xf32>
    %257 = arith.mulf %146, %256 : vector<2x128xf32>
    %258 = arith.addf %254, %257 : vector<2x128xf32>
    %c1_120 = arith.constant 1 : index
    %c6_121 = arith.constant 6 : index
    %259 = memref.load %arg6[%c1_120, %c6_121] : memref<8x8xf32, #tpu.memory_space<smem>>
    %260 = vector.broadcast %259 : f32 to vector<2x128xf32>
    %261 = arith.mulf %169, %260 : vector<2x128xf32>
    %262 = arith.addf %258, %261 : vector<2x128xf32>
    %c1_122 = arith.constant 1 : index
    %c7_123 = arith.constant 7 : index
    %263 = memref.load %arg6[%c1_122, %c7_123] : memref<8x8xf32, #tpu.memory_space<smem>>
    %264 = vector.broadcast %263 : f32 to vector<2x128xf32>
    %265 = arith.mulf %192, %264 : vector<2x128xf32>
    %266 = arith.addf %262, %265 : vector<2x128xf32>
    %cst_124 = arith.constant 0.000000e+00 : f32
    %267 = vector.broadcast %cst_124 : f32 to vector<2x128xf32>
    %268 = arith.cmpf ogt, %266, %267 : vector<2x128xf32>
    %269 = vector.broadcast %193 : f32 to vector<2x128xf32>
    %270 = arith.mulf %269, %266 : vector<2x128xf32>
    %271 = arith.select %268, %266, %270 : vector<2x128xi1>, vector<2x128xf32>
    %c2_125 = arith.constant 2 : index
    %c0_126 = arith.constant 0 : index
    %272 = memref.load %arg6[%c2_125, %c0_126] : memref<8x8xf32, #tpu.memory_space<smem>>
    %273 = vector.broadcast %272 : f32 to vector<2x128xf32>
    %274 = arith.mulf %31, %273 : vector<2x128xf32>
    %c2_127 = arith.constant 2 : index
    %275 = memref.load %arg7[%c2_127] : memref<8xf32, #tpu.memory_space<smem>>
    %276 = vector.broadcast %275 : f32 to vector<2x128xf32>
    %277 = arith.addf %274, %276 : vector<2x128xf32>
    %c2_128 = arith.constant 2 : index
    %c1_129 = arith.constant 1 : index
    %278 = memref.load %arg6[%c2_128, %c1_129] : memref<8x8xf32, #tpu.memory_space<smem>>
    %279 = vector.broadcast %278 : f32 to vector<2x128xf32>
    %280 = arith.mulf %54, %279 : vector<2x128xf32>
    %281 = arith.addf %277, %280 : vector<2x128xf32>
    %c2_130 = arith.constant 2 : index
    %c2_131 = arith.constant 2 : index
    %282 = memref.load %arg6[%c2_130, %c2_131] : memref<8x8xf32, #tpu.memory_space<smem>>
    %283 = vector.broadcast %282 : f32 to vector<2x128xf32>
    %284 = arith.mulf %77, %283 : vector<2x128xf32>
    %285 = arith.addf %281, %284 : vector<2x128xf32>
    %c2_132 = arith.constant 2 : index
    %c3_133 = arith.constant 3 : index
    %286 = memref.load %arg6[%c2_132, %c3_133] : memref<8x8xf32, #tpu.memory_space<smem>>
    %287 = vector.broadcast %286 : f32 to vector<2x128xf32>
    %288 = arith.mulf %100, %287 : vector<2x128xf32>
    %289 = arith.addf %285, %288 : vector<2x128xf32>
    %c2_134 = arith.constant 2 : index
    %c4_135 = arith.constant 4 : index
    %290 = memref.load %arg6[%c2_134, %c4_135] : memref<8x8xf32, #tpu.memory_space<smem>>
    %291 = vector.broadcast %290 : f32 to vector<2x128xf32>
    %292 = arith.mulf %123, %291 : vector<2x128xf32>
    %293 = arith.addf %289, %292 : vector<2x128xf32>
    %c2_136 = arith.constant 2 : index
    %c5_137 = arith.constant 5 : index
    %294 = memref.load %arg6[%c2_136, %c5_137] : memref<8x8xf32, #tpu.memory_space<smem>>
    %295 = vector.broadcast %294 : f32 to vector<2x128xf32>
    %296 = arith.mulf %146, %295 : vector<2x128xf32>
    %297 = arith.addf %293, %296 : vector<2x128xf32>
    %c2_138 = arith.constant 2 : index
    %c6_139 = arith.constant 6 : index
    %298 = memref.load %arg6[%c2_138, %c6_139] : memref<8x8xf32, #tpu.memory_space<smem>>
    %299 = vector.broadcast %298 : f32 to vector<2x128xf32>
    %300 = arith.mulf %169, %299 : vector<2x128xf32>
    %301 = arith.addf %297, %300 : vector<2x128xf32>
    %c2_140 = arith.constant 2 : index
    %c7_141 = arith.constant 7 : index
    %302 = memref.load %arg6[%c2_140, %c7_141] : memref<8x8xf32, #tpu.memory_space<smem>>
    %303 = vector.broadcast %302 : f32 to vector<2x128xf32>
    %304 = arith.mulf %192, %303 : vector<2x128xf32>
    %305 = arith.addf %301, %304 : vector<2x128xf32>
    %cst_142 = arith.constant 0.000000e+00 : f32
    %306 = vector.broadcast %cst_142 : f32 to vector<2x128xf32>
    %307 = arith.cmpf ogt, %305, %306 : vector<2x128xf32>
    %308 = vector.broadcast %193 : f32 to vector<2x128xf32>
    %309 = arith.mulf %308, %305 : vector<2x128xf32>
    %310 = arith.select %307, %305, %309 : vector<2x128xi1>, vector<2x128xf32>
    %c3_143 = arith.constant 3 : index
    %c0_144 = arith.constant 0 : index
    %311 = memref.load %arg6[%c3_143, %c0_144] : memref<8x8xf32, #tpu.memory_space<smem>>
    %312 = vector.broadcast %311 : f32 to vector<2x128xf32>
    %313 = arith.mulf %31, %312 : vector<2x128xf32>
    %c3_145 = arith.constant 3 : index
    %314 = memref.load %arg7[%c3_145] : memref<8xf32, #tpu.memory_space<smem>>
    %315 = vector.broadcast %314 : f32 to vector<2x128xf32>
    %316 = arith.addf %313, %315 : vector<2x128xf32>
    %c3_146 = arith.constant 3 : index
    %c1_147 = arith.constant 1 : index
    %317 = memref.load %arg6[%c3_146, %c1_147] : memref<8x8xf32, #tpu.memory_space<smem>>
    %318 = vector.broadcast %317 : f32 to vector<2x128xf32>
    %319 = arith.mulf %54, %318 : vector<2x128xf32>
    %320 = arith.addf %316, %319 : vector<2x128xf32>
    %c3_148 = arith.constant 3 : index
    %c2_149 = arith.constant 2 : index
    %321 = memref.load %arg6[%c3_148, %c2_149] : memref<8x8xf32, #tpu.memory_space<smem>>
    %322 = vector.broadcast %321 : f32 to vector<2x128xf32>
    %323 = arith.mulf %77, %322 : vector<2x128xf32>
    %324 = arith.addf %320, %323 : vector<2x128xf32>
    %c3_150 = arith.constant 3 : index
    %c3_151 = arith.constant 3 : index
    %325 = memref.load %arg6[%c3_150, %c3_151] : memref<8x8xf32, #tpu.memory_space<smem>>
    %326 = vector.broadcast %325 : f32 to vector<2x128xf32>
    %327 = arith.mulf %100, %326 : vector<2x128xf32>
    %328 = arith.addf %324, %327 : vector<2x128xf32>
    %c3_152 = arith.constant 3 : index
    %c4_153 = arith.constant 4 : index
    %329 = memref.load %arg6[%c3_152, %c4_153] : memref<8x8xf32, #tpu.memory_space<smem>>
    %330 = vector.broadcast %329 : f32 to vector<2x128xf32>
    %331 = arith.mulf %123, %330 : vector<2x128xf32>
    %332 = arith.addf %328, %331 : vector<2x128xf32>
    %c3_154 = arith.constant 3 : index
    %c5_155 = arith.constant 5 : index
    %333 = memref.load %arg6[%c3_154, %c5_155] : memref<8x8xf32, #tpu.memory_space<smem>>
    %334 = vector.broadcast %333 : f32 to vector<2x128xf32>
    %335 = arith.mulf %146, %334 : vector<2x128xf32>
    %336 = arith.addf %332, %335 : vector<2x128xf32>
    %c3_156 = arith.constant 3 : index
    %c6_157 = arith.constant 6 : index
    %337 = memref.load %arg6[%c3_156, %c6_157] : memref<8x8xf32, #tpu.memory_space<smem>>
    %338 = vector.broadcast %337 : f32 to vector<2x128xf32>
    %339 = arith.mulf %169, %338 : vector<2x128xf32>
    %340 = arith.addf %336, %339 : vector<2x128xf32>
    %c3_158 = arith.constant 3 : index
    %c7_159 = arith.constant 7 : index
    %341 = memref.load %arg6[%c3_158, %c7_159] : memref<8x8xf32, #tpu.memory_space<smem>>
    %342 = vector.broadcast %341 : f32 to vector<2x128xf32>
    %343 = arith.mulf %192, %342 : vector<2x128xf32>
    %344 = arith.addf %340, %343 : vector<2x128xf32>
    %cst_160 = arith.constant 0.000000e+00 : f32
    %345 = vector.broadcast %cst_160 : f32 to vector<2x128xf32>
    %346 = arith.cmpf ogt, %344, %345 : vector<2x128xf32>
    %347 = vector.broadcast %193 : f32 to vector<2x128xf32>
    %348 = arith.mulf %347, %344 : vector<2x128xf32>
    %349 = arith.select %346, %344, %348 : vector<2x128xi1>, vector<2x128xf32>
    %c4_161 = arith.constant 4 : index
    %c0_162 = arith.constant 0 : index
    %350 = memref.load %arg6[%c4_161, %c0_162] : memref<8x8xf32, #tpu.memory_space<smem>>
    %351 = vector.broadcast %350 : f32 to vector<2x128xf32>
    %352 = arith.mulf %31, %351 : vector<2x128xf32>
    %c4_163 = arith.constant 4 : index
    %353 = memref.load %arg7[%c4_163] : memref<8xf32, #tpu.memory_space<smem>>
    %354 = vector.broadcast %353 : f32 to vector<2x128xf32>
    %355 = arith.addf %352, %354 : vector<2x128xf32>
    %c4_164 = arith.constant 4 : index
    %c1_165 = arith.constant 1 : index
    %356 = memref.load %arg6[%c4_164, %c1_165] : memref<8x8xf32, #tpu.memory_space<smem>>
    %357 = vector.broadcast %356 : f32 to vector<2x128xf32>
    %358 = arith.mulf %54, %357 : vector<2x128xf32>
    %359 = arith.addf %355, %358 : vector<2x128xf32>
    %c4_166 = arith.constant 4 : index
    %c2_167 = arith.constant 2 : index
    %360 = memref.load %arg6[%c4_166, %c2_167] : memref<8x8xf32, #tpu.memory_space<smem>>
    %361 = vector.broadcast %360 : f32 to vector<2x128xf32>
    %362 = arith.mulf %77, %361 : vector<2x128xf32>
    %363 = arith.addf %359, %362 : vector<2x128xf32>
    %c4_168 = arith.constant 4 : index
    %c3_169 = arith.constant 3 : index
    %364 = memref.load %arg6[%c4_168, %c3_169] : memref<8x8xf32, #tpu.memory_space<smem>>
    %365 = vector.broadcast %364 : f32 to vector<2x128xf32>
    %366 = arith.mulf %100, %365 : vector<2x128xf32>
    %367 = arith.addf %363, %366 : vector<2x128xf32>
    %c4_170 = arith.constant 4 : index
    %c4_171 = arith.constant 4 : index
    %368 = memref.load %arg6[%c4_170, %c4_171] : memref<8x8xf32, #tpu.memory_space<smem>>
    %369 = vector.broadcast %368 : f32 to vector<2x128xf32>
    %370 = arith.mulf %123, %369 : vector<2x128xf32>
    %371 = arith.addf %367, %370 : vector<2x128xf32>
    %c4_172 = arith.constant 4 : index
    %c5_173 = arith.constant 5 : index
    %372 = memref.load %arg6[%c4_172, %c5_173] : memref<8x8xf32, #tpu.memory_space<smem>>
    %373 = vector.broadcast %372 : f32 to vector<2x128xf32>
    %374 = arith.mulf %146, %373 : vector<2x128xf32>
    %375 = arith.addf %371, %374 : vector<2x128xf32>
    %c4_174 = arith.constant 4 : index
    %c6_175 = arith.constant 6 : index
    %376 = memref.load %arg6[%c4_174, %c6_175] : memref<8x8xf32, #tpu.memory_space<smem>>
    %377 = vector.broadcast %376 : f32 to vector<2x128xf32>
    %378 = arith.mulf %169, %377 : vector<2x128xf32>
    %379 = arith.addf %375, %378 : vector<2x128xf32>
    %c4_176 = arith.constant 4 : index
    %c7_177 = arith.constant 7 : index
    %380 = memref.load %arg6[%c4_176, %c7_177] : memref<8x8xf32, #tpu.memory_space<smem>>
    %381 = vector.broadcast %380 : f32 to vector<2x128xf32>
    %382 = arith.mulf %192, %381 : vector<2x128xf32>
    %383 = arith.addf %379, %382 : vector<2x128xf32>
    %cst_178 = arith.constant 0.000000e+00 : f32
    %384 = vector.broadcast %cst_178 : f32 to vector<2x128xf32>
    %385 = arith.cmpf ogt, %383, %384 : vector<2x128xf32>
    %386 = vector.broadcast %193 : f32 to vector<2x128xf32>
    %387 = arith.mulf %386, %383 : vector<2x128xf32>
    %388 = arith.select %385, %383, %387 : vector<2x128xi1>, vector<2x128xf32>
    %c5_179 = arith.constant 5 : index
    %c0_180 = arith.constant 0 : index
    %389 = memref.load %arg6[%c5_179, %c0_180] : memref<8x8xf32, #tpu.memory_space<smem>>
    %390 = vector.broadcast %389 : f32 to vector<2x128xf32>
    %391 = arith.mulf %31, %390 : vector<2x128xf32>
    %c5_181 = arith.constant 5 : index
    %392 = memref.load %arg7[%c5_181] : memref<8xf32, #tpu.memory_space<smem>>
    %393 = vector.broadcast %392 : f32 to vector<2x128xf32>
    %394 = arith.addf %391, %393 : vector<2x128xf32>
    %c5_182 = arith.constant 5 : index
    %c1_183 = arith.constant 1 : index
    %395 = memref.load %arg6[%c5_182, %c1_183] : memref<8x8xf32, #tpu.memory_space<smem>>
    %396 = vector.broadcast %395 : f32 to vector<2x128xf32>
    %397 = arith.mulf %54, %396 : vector<2x128xf32>
    %398 = arith.addf %394, %397 : vector<2x128xf32>
    %c5_184 = arith.constant 5 : index
    %c2_185 = arith.constant 2 : index
    %399 = memref.load %arg6[%c5_184, %c2_185] : memref<8x8xf32, #tpu.memory_space<smem>>
    %400 = vector.broadcast %399 : f32 to vector<2x128xf32>
    %401 = arith.mulf %77, %400 : vector<2x128xf32>
    %402 = arith.addf %398, %401 : vector<2x128xf32>
    %c5_186 = arith.constant 5 : index
    %c3_187 = arith.constant 3 : index
    %403 = memref.load %arg6[%c5_186, %c3_187] : memref<8x8xf32, #tpu.memory_space<smem>>
    %404 = vector.broadcast %403 : f32 to vector<2x128xf32>
    %405 = arith.mulf %100, %404 : vector<2x128xf32>
    %406 = arith.addf %402, %405 : vector<2x128xf32>
    %c5_188 = arith.constant 5 : index
    %c4_189 = arith.constant 4 : index
    %407 = memref.load %arg6[%c5_188, %c4_189] : memref<8x8xf32, #tpu.memory_space<smem>>
    %408 = vector.broadcast %407 : f32 to vector<2x128xf32>
    %409 = arith.mulf %123, %408 : vector<2x128xf32>
    %410 = arith.addf %406, %409 : vector<2x128xf32>
    %c5_190 = arith.constant 5 : index
    %c5_191 = arith.constant 5 : index
    %411 = memref.load %arg6[%c5_190, %c5_191] : memref<8x8xf32, #tpu.memory_space<smem>>
    %412 = vector.broadcast %411 : f32 to vector<2x128xf32>
    %413 = arith.mulf %146, %412 : vector<2x128xf32>
    %414 = arith.addf %410, %413 : vector<2x128xf32>
    %c5_192 = arith.constant 5 : index
    %c6_193 = arith.constant 6 : index
    %415 = memref.load %arg6[%c5_192, %c6_193] : memref<8x8xf32, #tpu.memory_space<smem>>
    %416 = vector.broadcast %415 : f32 to vector<2x128xf32>
    %417 = arith.mulf %169, %416 : vector<2x128xf32>
    %418 = arith.addf %414, %417 : vector<2x128xf32>
    %c5_194 = arith.constant 5 : index
    %c7_195 = arith.constant 7 : index
    %419 = memref.load %arg6[%c5_194, %c7_195] : memref<8x8xf32, #tpu.memory_space<smem>>
    %420 = vector.broadcast %419 : f32 to vector<2x128xf32>
    %421 = arith.mulf %192, %420 : vector<2x128xf32>
    %422 = arith.addf %418, %421 : vector<2x128xf32>
    %cst_196 = arith.constant 0.000000e+00 : f32
    %423 = vector.broadcast %cst_196 : f32 to vector<2x128xf32>
    %424 = arith.cmpf ogt, %422, %423 : vector<2x128xf32>
    %425 = vector.broadcast %193 : f32 to vector<2x128xf32>
    %426 = arith.mulf %425, %422 : vector<2x128xf32>
    %427 = arith.select %424, %422, %426 : vector<2x128xi1>, vector<2x128xf32>
    %c6_197 = arith.constant 6 : index
    %c0_198 = arith.constant 0 : index
    %428 = memref.load %arg6[%c6_197, %c0_198] : memref<8x8xf32, #tpu.memory_space<smem>>
    %429 = vector.broadcast %428 : f32 to vector<2x128xf32>
    %430 = arith.mulf %31, %429 : vector<2x128xf32>
    %c6_199 = arith.constant 6 : index
    %431 = memref.load %arg7[%c6_199] : memref<8xf32, #tpu.memory_space<smem>>
    %432 = vector.broadcast %431 : f32 to vector<2x128xf32>
    %433 = arith.addf %430, %432 : vector<2x128xf32>
    %c6_200 = arith.constant 6 : index
    %c1_201 = arith.constant 1 : index
    %434 = memref.load %arg6[%c6_200, %c1_201] : memref<8x8xf32, #tpu.memory_space<smem>>
    %435 = vector.broadcast %434 : f32 to vector<2x128xf32>
    %436 = arith.mulf %54, %435 : vector<2x128xf32>
    %437 = arith.addf %433, %436 : vector<2x128xf32>
    %c6_202 = arith.constant 6 : index
    %c2_203 = arith.constant 2 : index
    %438 = memref.load %arg6[%c6_202, %c2_203] : memref<8x8xf32, #tpu.memory_space<smem>>
    %439 = vector.broadcast %438 : f32 to vector<2x128xf32>
    %440 = arith.mulf %77, %439 : vector<2x128xf32>
    %441 = arith.addf %437, %440 : vector<2x128xf32>
    %c6_204 = arith.constant 6 : index
    %c3_205 = arith.constant 3 : index
    %442 = memref.load %arg6[%c6_204, %c3_205] : memref<8x8xf32, #tpu.memory_space<smem>>
    %443 = vector.broadcast %442 : f32 to vector<2x128xf32>
    %444 = arith.mulf %100, %443 : vector<2x128xf32>
    %445 = arith.addf %441, %444 : vector<2x128xf32>
    %c6_206 = arith.constant 6 : index
    %c4_207 = arith.constant 4 : index
    %446 = memref.load %arg6[%c6_206, %c4_207] : memref<8x8xf32, #tpu.memory_space<smem>>
    %447 = vector.broadcast %446 : f32 to vector<2x128xf32>
    %448 = arith.mulf %123, %447 : vector<2x128xf32>
    %449 = arith.addf %445, %448 : vector<2x128xf32>
    %c6_208 = arith.constant 6 : index
    %c5_209 = arith.constant 5 : index
    %450 = memref.load %arg6[%c6_208, %c5_209] : memref<8x8xf32, #tpu.memory_space<smem>>
    %451 = vector.broadcast %450 : f32 to vector<2x128xf32>
    %452 = arith.mulf %146, %451 : vector<2x128xf32>
    %453 = arith.addf %449, %452 : vector<2x128xf32>
    %c6_210 = arith.constant 6 : index
    %c6_211 = arith.constant 6 : index
    %454 = memref.load %arg6[%c6_210, %c6_211] : memref<8x8xf32, #tpu.memory_space<smem>>
    %455 = vector.broadcast %454 : f32 to vector<2x128xf32>
    %456 = arith.mulf %169, %455 : vector<2x128xf32>
    %457 = arith.addf %453, %456 : vector<2x128xf32>
    %c6_212 = arith.constant 6 : index
    %c7_213 = arith.constant 7 : index
    %458 = memref.load %arg6[%c6_212, %c7_213] : memref<8x8xf32, #tpu.memory_space<smem>>
    %459 = vector.broadcast %458 : f32 to vector<2x128xf32>
    %460 = arith.mulf %192, %459 : vector<2x128xf32>
    %461 = arith.addf %457, %460 : vector<2x128xf32>
    %cst_214 = arith.constant 0.000000e+00 : f32
    %462 = vector.broadcast %cst_214 : f32 to vector<2x128xf32>
    %463 = arith.cmpf ogt, %461, %462 : vector<2x128xf32>
    %464 = vector.broadcast %193 : f32 to vector<2x128xf32>
    %465 = arith.mulf %464, %461 : vector<2x128xf32>
    %466 = arith.select %463, %461, %465 : vector<2x128xi1>, vector<2x128xf32>
    %c7_215 = arith.constant 7 : index
    %c0_216 = arith.constant 0 : index
    %467 = memref.load %arg6[%c7_215, %c0_216] : memref<8x8xf32, #tpu.memory_space<smem>>
    %468 = vector.broadcast %467 : f32 to vector<2x128xf32>
    %469 = arith.mulf %31, %468 : vector<2x128xf32>
    %c7_217 = arith.constant 7 : index
    %470 = memref.load %arg7[%c7_217] : memref<8xf32, #tpu.memory_space<smem>>
    %471 = vector.broadcast %470 : f32 to vector<2x128xf32>
    %472 = arith.addf %469, %471 : vector<2x128xf32>
    %c7_218 = arith.constant 7 : index
    %c1_219 = arith.constant 1 : index
    %473 = memref.load %arg6[%c7_218, %c1_219] : memref<8x8xf32, #tpu.memory_space<smem>>
    %474 = vector.broadcast %473 : f32 to vector<2x128xf32>
    %475 = arith.mulf %54, %474 : vector<2x128xf32>
    %476 = arith.addf %472, %475 : vector<2x128xf32>
    %c7_220 = arith.constant 7 : index
    %c2_221 = arith.constant 2 : index
    %477 = memref.load %arg6[%c7_220, %c2_221] : memref<8x8xf32, #tpu.memory_space<smem>>
    %478 = vector.broadcast %477 : f32 to vector<2x128xf32>
    %479 = arith.mulf %77, %478 : vector<2x128xf32>
    %480 = arith.addf %476, %479 : vector<2x128xf32>
    %c7_222 = arith.constant 7 : index
    %c3_223 = arith.constant 3 : index
    %481 = memref.load %arg6[%c7_222, %c3_223] : memref<8x8xf32, #tpu.memory_space<smem>>
    %482 = vector.broadcast %481 : f32 to vector<2x128xf32>
    %483 = arith.mulf %100, %482 : vector<2x128xf32>
    %484 = arith.addf %480, %483 : vector<2x128xf32>
    %c7_224 = arith.constant 7 : index
    %c4_225 = arith.constant 4 : index
    %485 = memref.load %arg6[%c7_224, %c4_225] : memref<8x8xf32, #tpu.memory_space<smem>>
    %486 = vector.broadcast %485 : f32 to vector<2x128xf32>
    %487 = arith.mulf %123, %486 : vector<2x128xf32>
    %488 = arith.addf %484, %487 : vector<2x128xf32>
    %c7_226 = arith.constant 7 : index
    %c5_227 = arith.constant 5 : index
    %489 = memref.load %arg6[%c7_226, %c5_227] : memref<8x8xf32, #tpu.memory_space<smem>>
    %490 = vector.broadcast %489 : f32 to vector<2x128xf32>
    %491 = arith.mulf %146, %490 : vector<2x128xf32>
    %492 = arith.addf %488, %491 : vector<2x128xf32>
    %c7_228 = arith.constant 7 : index
    %c6_229 = arith.constant 6 : index
    %493 = memref.load %arg6[%c7_228, %c6_229] : memref<8x8xf32, #tpu.memory_space<smem>>
    %494 = vector.broadcast %493 : f32 to vector<2x128xf32>
    %495 = arith.mulf %169, %494 : vector<2x128xf32>
    %496 = arith.addf %492, %495 : vector<2x128xf32>
    %c7_230 = arith.constant 7 : index
    %c7_231 = arith.constant 7 : index
    %497 = memref.load %arg6[%c7_230, %c7_231] : memref<8x8xf32, #tpu.memory_space<smem>>
    %498 = vector.broadcast %497 : f32 to vector<2x128xf32>
    %499 = arith.mulf %192, %498 : vector<2x128xf32>
    %500 = arith.addf %496, %499 : vector<2x128xf32>
    %cst_232 = arith.constant 0.000000e+00 : f32
    %501 = vector.broadcast %cst_232 : f32 to vector<2x128xf32>
    %502 = arith.cmpf ogt, %500, %501 : vector<2x128xf32>
    %503 = vector.broadcast %193 : f32 to vector<2x128xf32>
    %504 = arith.mulf %503, %500 : vector<2x128xf32>
    %505 = arith.select %502, %500, %504 : vector<2x128xi1>, vector<2x128xf32>
    %c2_233 = arith.constant 2 : index
    %506 = memref.load %arg2[%c2_233] : memref<3xf32, #tpu.memory_space<smem>>
    %c0_234 = arith.constant 0 : index
    %c0_235 = arith.constant 0 : index
    %507 = memref.load %arg8[%c0_234, %c0_235] : memref<1x8xf32, #tpu.memory_space<smem>>
    %508 = vector.broadcast %507 : f32 to vector<2x128xf32>
    %509 = arith.mulf %232, %508 : vector<2x128xf32>
    %c0_236 = arith.constant 0 : index
    %510 = memref.load %arg9[%c0_236] : memref<1xf32, #tpu.memory_space<smem>>
    %511 = vector.broadcast %510 : f32 to vector<2x128xf32>
    %512 = arith.addf %509, %511 : vector<2x128xf32>
    %c0_237 = arith.constant 0 : index
    %c1_238 = arith.constant 1 : index
    %513 = memref.load %arg8[%c0_237, %c1_238] : memref<1x8xf32, #tpu.memory_space<smem>>
    %514 = vector.broadcast %513 : f32 to vector<2x128xf32>
    %515 = arith.mulf %271, %514 : vector<2x128xf32>
    %516 = arith.addf %512, %515 : vector<2x128xf32>
    %c0_239 = arith.constant 0 : index
    %c2_240 = arith.constant 2 : index
    %517 = memref.load %arg8[%c0_239, %c2_240] : memref<1x8xf32, #tpu.memory_space<smem>>
    %518 = vector.broadcast %517 : f32 to vector<2x128xf32>
    %519 = arith.mulf %310, %518 : vector<2x128xf32>
    %520 = arith.addf %516, %519 : vector<2x128xf32>
    %c0_241 = arith.constant 0 : index
    %c3_242 = arith.constant 3 : index
    %521 = memref.load %arg8[%c0_241, %c3_242] : memref<1x8xf32, #tpu.memory_space<smem>>
    %522 = vector.broadcast %521 : f32 to vector<2x128xf32>
    %523 = arith.mulf %349, %522 : vector<2x128xf32>
    %524 = arith.addf %520, %523 : vector<2x128xf32>
    %c0_243 = arith.constant 0 : index
    %c4_244 = arith.constant 4 : index
    %525 = memref.load %arg8[%c0_243, %c4_244] : memref<1x8xf32, #tpu.memory_space<smem>>
    %526 = vector.broadcast %525 : f32 to vector<2x128xf32>
    %527 = arith.mulf %388, %526 : vector<2x128xf32>
    %528 = arith.addf %524, %527 : vector<2x128xf32>
    %c0_245 = arith.constant 0 : index
    %c5_246 = arith.constant 5 : index
    %529 = memref.load %arg8[%c0_245, %c5_246] : memref<1x8xf32, #tpu.memory_space<smem>>
    %530 = vector.broadcast %529 : f32 to vector<2x128xf32>
    %531 = arith.mulf %427, %530 : vector<2x128xf32>
    %532 = arith.addf %528, %531 : vector<2x128xf32>
    %c0_247 = arith.constant 0 : index
    %c6_248 = arith.constant 6 : index
    %533 = memref.load %arg8[%c0_247, %c6_248] : memref<1x8xf32, #tpu.memory_space<smem>>
    %534 = vector.broadcast %533 : f32 to vector<2x128xf32>
    %535 = arith.mulf %466, %534 : vector<2x128xf32>
    %536 = arith.addf %532, %535 : vector<2x128xf32>
    %c0_249 = arith.constant 0 : index
    %c7_250 = arith.constant 7 : index
    %537 = memref.load %arg8[%c0_249, %c7_250] : memref<1x8xf32, #tpu.memory_space<smem>>
    %538 = vector.broadcast %537 : f32 to vector<2x128xf32>
    %539 = arith.mulf %505, %538 : vector<2x128xf32>
    %540 = arith.addf %536, %539 : vector<2x128xf32>
    %cst_251 = arith.constant 0.000000e+00 : f32
    %541 = vector.broadcast %cst_251 : f32 to vector<2x128xf32>
    %542 = arith.cmpf ogt, %540, %541 : vector<2x128xf32>
    %543 = vector.broadcast %506 : f32 to vector<2x128xf32>
    %544 = arith.mulf %543, %540 : vector<2x128xf32>
    %545 = arith.select %542, %540, %544 : vector<2x128xi1>, vector<2x128xf32>
    %c0_252 = arith.constant 0 : index
    %c0_253 = arith.constant 0 : index
    %c0_254 = arith.constant 0 : index
    %c0_255 = arith.constant 0 : index
    %546 = vector.load %arg10[%c0_252, %c0_253, %c0_254, %c0_255] : memref<1x1x2x128xf32, #tpu.memory_space<vmem>>, vector<1x1x2x128xf32>
    %547 = vector.shape_cast %546 : vector<1x1x2x128xf32> to vector<2x128xf32>
    %548 = vector.shape_cast %545 : vector<2x128xf32> to vector<1x1x2x128xf32>
    tpu.vector_store %arg10[%c0_252, %c0_253, %c0_254, %c0_255], %548 {strides = array<i32>} : memref<1x1x2x128xf32, #tpu.memory_space<vmem>>, vector<1x1x2x128xf32>,
    return
  }
  func.func @transform_0(%arg0: i32, %arg1: i32) -> i32 {
    %c0_i32 = arith.constant 0 : i32
    %c0_i32_0 = arith.constant 0 : i32
    return %c0_i32 : i32
  }
  func.func @transform_1(%arg0: i32, %arg1: i32) -> (i32, i32, i32, i32) {
    %c0_i32 = arith.constant 0 : i32
    %c0_i32_0 = arith.constant 0 : i32
    %c0_i32_1 = arith.constant 0 : i32
    return %arg0, %c0_i32, %arg1, %c0_i32_0 : i32, i32, i32, i32
  }
  func.func @transform_2(%arg0: i32, %arg1: i32) -> (i32, i32) {
    %c0_i32 = arith.constant 0 : i32
    %c0_i32_0 = arith.constant 0 : i32
    %c0_i32_1 = arith.constant 0 : i32
    return %c0_i32, %c0_i32_0 : i32, i32
  }
  func.func @transform_3(%arg0: i32, %arg1: i32) -> i32 {
    %c0_i32 = arith.constant 0 : i32
    %c0_i32_0 = arith.constant 0 : i32
    return %c0_i32 : i32
  }
  func.func @transform_4(%arg0: i32, %arg1: i32) -> (i32, i32) {
    %c0_i32 = arith.constant 0 : i32
    %c0_i32_0 = arith.constant 0 : i32
    %c0_i32_1 = arith.constant 0 : i32
    return %c0_i32, %c0_i32_0 : i32, i32
  }
  func.func @transform_5(%arg0: i32, %arg1: i32) -> i32 {
    %c0_i32 = arith.constant 0 : i32
    %c0_i32_0 = arith.constant 0 : i32
    return %c0_i32 : i32
  }
  func.func @transform_6(%arg0: i32, %arg1: i32) -> (i32, i32) {
    %c0_i32 = arith.constant 0 : i32
    %c0_i32_0 = arith.constant 0 : i32
    %c0_i32_1 = arith.constant 0 : i32
    return %c0_i32, %c0_i32_0 : i32, i32
  }
  func.func @transform_7(%arg0: i32, %arg1: i32) -> i32 {
    %c0_i32 = arith.constant 0 : i32
    %c0_i32_0 = arith.constant 0 : i32
    return %c0_i32 : i32
  }
  func.func @transform_8(%arg0: i32, %arg1: i32) -> (i32, i32, i32, i32) {
    %c0_i32 = arith.constant 0 : i32
    %c0_i32_0 = arith.constant 0 : i32
    %c0_i32_1 = arith.constant 0 : i32
    return %arg0, %c0_i32, %arg1, %c0_i32_0 : i32, i32, i32, i32
  }
}

</mosaic_0001>

<llo_original>
// kernel: pixelwise_linear.1
$region0: #{pixelwise_linear.1}
  #allocation0 [shape = 'u32[]', space=smem, size = 0x4, offset = 0x4, fixed_abs, tag = 'smem constant byte address 0x4 - core index']
  #allocation1 [shape = 'u32[144,128]{1,0:T(1,128)}', space=vmem, size = 0x12000, scoped, tag = 'internal scratch']
  #allocation2 [shape = 'f32[1]{0:T(128)S(6)}', space=smem, size = 0x200, scoped, tag = 'scoped memory for pixelwise_linear.1']
  %s0 = inlined_call_operand.vmem [shape: f32[3], index: 0, kind: input, shape index: {}]
  %s1 = inlined_call_operand.vmem [shape: f32[2,4,2,128], index: 1, kind: input, shape index: {}]
  %s2 = inlined_call_operand.vmem [shape: f32[8,4], index: 2, kind: input, shape index: {}]
  %s3 = inlined_call_operand.vmem [shape: f32[8], index: 3, kind: input, shape index: {}]
  %s4 = inlined_call_operand.vmem [shape: f32[8,8], index: 4, kind: input, shape index: {}]
  %s5 = inlined_call_operand.vmem [shape: f32[8], index: 5, kind: input, shape index: {}]
  %s6 = inlined_call_operand.vmem [shape: f32[1,8], index: 6, kind: input, shape index: {}]
  %s7 = inlined_call_operand.<no memory space> [shape: f32[1], index: 7, kind: input, shape index: {}]
  %s8 = inlined_call_operand.vmem [shape: f32[2,1,2,128], index: 8, kind: output, shape index: {}]
  %s9 = sld [smem:[#allocation0]]
  $region89: #{pixelwise_linear.1} parent=0
    _
  %s11 = ssub.s32 1, %s9
  %s12 = scalar_select 0, %s11, %s9
  %13 = sst [smem:[#allocation2]] %s7
  $region1: #{pixelwise_linear.1} parent=0
    #allocation3 [shape = 'u8[512]{0}', space=smem, size = 0x200, scoped, tag = 'input window, operand 0, single buffered']
    #allocation4 [shape = 's32[2]{0}', space=sflag, size = 0x8, scoped, tag = 'scoped memory for pixelwise_linear.1']
    #allocation5 [shape = 'u8[4096]{0}', space=smem, size = 0x1000, scoped, tag = 'input window, operand 2, single buffered']
    #allocation6 [shape = 's32[1]{0}', space=sflag, size = 0x4, scoped, tag = 'scoped memory for pixelwise_linear.1']
    #allocation7 [shape = 'u8[512]{0}', space=smem, size = 0x200, scoped, tag = 'input window, operand 3, single buffered']
    #allocation8 [shape = 'u8[4096]{0}', space=smem, size = 0x1000, scoped, tag = 'input window, operand 4, single buffered']
    #allocation9 [shape = 's32[1]{0}', space=sflag, size = 0x4, scoped, tag = 'scoped memory for pixelwise_linear.1']
    #allocation10 [shape = 'u8[512]{0}', space=smem, size = 0x200, scoped, tag = 'input window, operand 5, single buffered']
    #allocation11 [shape = 'u8[512]{0}', space=smem, size = 0x200, scoped, tag = 'input window, operand 6, single buffered']
    #allocation12 [shape = 's32[1]{0}', space=sflag, size = 0x4, scoped, tag = 'scoped memory for pixelwise_linear.1']
    %14 = vsyncpa [#allocation4], 0
    %15 = vsyncpa [#allocation6], 0
    %16 = vsyncpa [#allocation9], 0
    %17 = vsyncpa [#allocation12], 0
    loop: start=0, step=1, limit=4
    $region2: #{pixelwise_linear.1} parent=1 // loop_pre_header
      _
    $region3: #{pixelwise_linear.1} parent=1 // loop_header
      %s19 = sphi 0, %s23
      %p20 = scmp.ge.s32.totalorder %s19, 4
      %s26 = sphi 0, %s38
      %s27 = sphi 0, %s34
      %s28 = sphi 0, %s26
      %s29 = sphi 0, %s27
      %s30 = sphi 0, %s28
      %s31 = sphi 0, %s29
      %s39 = sphi 0, %s39
      %s41 = sphi 0, %s39
      %s42 = sphi 0, %s41
      %s56 = sphi 0, %s42
      %s64 = sphi 0, %s66
      %s67 = sphi 0, %s64
      %s68 = sphi 0, %s67
      %s84 = sphi 0, %s68
      %s88 = sphi 0, %s88
      %s90 = sphi 0, %s88
      %s91 = sphi 0, %s90
      %s105 = sphi 0, %s91
      %s109 = sphi 0, %s109
      %s111 = sphi 0, %s109
      %s112 = sphi 0, %s111
      %s126 = sphi 0, %s112
      %s130 = sphi 0, %s130
      %s132 = sphi 0, %s130
      %s133 = sphi 0, %s132
      %s147 = sphi 0, %s133
      %s151 = sphi 0, %s151
      %s153 = sphi 0, %s151
      %s154 = sphi 0, %s153
      %s168 = sphi 0, %s154
      %s172 = sphi 0, %s172
      %s174 = sphi 0, %s172
      %s175 = sphi 0, %s174
      %s189 = sphi 0, %s175
      %s193 = sphi 0, %s193
      %s195 = sphi 0, %s193
      %s196 = sphi 0, %s195
      %s210 = sphi 0, %s196
      %s218 = sphi 0, %s220
      %s221 = sphi 0, %s218
      %s222 = sphi 0, %s221
      %s238 = sphi 0, %s222
    $region4: #{pixelwise_linear.1} parent=1 // loop_header_branch
      %22 = sbr.rel (%p20) target = $region8
    $region5: #{pixelwise_linear.1} parent=1 // loop_body
      %s24 = ssub.s32 %s19, 1
      %s25 = ssub.s32 %s19, 2
      %s32 = sadd.s32 1, %s27
      %p33 = scmp.ge.s32.totalorder %s32, 1
      %s34 = scalar_select %p33, 0, %s32
      %s35 = sadd.s32 1, %s26
      %s36 = scalar_select %p33, %s35, %s26
      %p37 = scmp.ge.s32.totalorder %s36, 2
      %s38 = scalar_select %p37, 0, %s36
      %s40 = sadd.s32 %s39, 1
      %p43 = scmp.eq.s32.totalorder %s19, 1
      %p44 = scmp.ne.s32.totalorder %s39, %s41
      %p45 = scmp.eq.s32.totalorder %s19, 0
      %p46 = por %p44, %p45
      %p47 = scmp.ne.s32.totalorder %s39, %s41
      %p48 = scmp.eq.s32.totalorder %s24, 1
      %p49 = por %p47, %p48
      %p50 = scmp.ne.s32.totalorder %s41, %s42
      %p51 = scmp.eq.s32.totalorder %s24, 0
      %p52 = por %p50, %p51
      %p53 = scmp.ne.s32.totalorder %s41, %s42
      %p54 = scmp.eq.s32.totalorder %s25, 1
      %p55 = por %p53, %p54
      %p57 = scmp.ne.s32.totalorder %s42, %s56
      %p58 = scmp.eq.s32.totalorder %s25, 0
      %p59 = por %p57, %p58
      %s60 = ssub.s32 %s26, %s38
      %s61 = ssub.s32 %s27, %s34
      %s62 = sor.u32 %s60, %s61
      %p63 = scmp.eq.s32.totalorder %s62, 0
      %s65 = sadd.s32 %s64, 1
      %s66 = scalar_select %p63, %s64, %s65
      %p69 = pneg %p63
      %p70 = scmp.eq.s32.totalorder %s19, 1
      %p71 = por %p69, %p70
      %p72 = scmp.ne.s32.totalorder %s64, %s67
      %p73 = scmp.eq.s32.totalorder %s19, 0
      %p74 = por %p72, %p73
      %p75 = scmp.ne.s32.totalorder %s64, %s67
      %p76 = scmp.eq.s32.totalorder %s24, 1
      %p77 = por %p75, %p76
      %p78 = scmp.ne.s32.totalorder %s67, %s68
      %p79 = scmp.eq.s32.totalorder %s24, 0
      %p80 = por %p78, %p79
      %p81 = scmp.ne.s32.totalorder %s67, %s68
      %p82 = scmp.eq.s32.totalorder %s25, 1
      %p83 = por %p81, %p82
      %p85 = scmp.ne.s32.totalorder %s68, %s84
      %p86 = scmp.eq.s32.totalorder %s25, 0
      %p87 = por %p85, %p86
      %s89 = sadd.s32 %s88, 1
      %p92 = scmp.eq.s32.totalorder %s19, 1
      %p93 = scmp.ne.s32.totalorder %s88, %s90
      %p94 = scmp.eq.s32.totalorder %s19, 0
      %p95 = por %p93, %p94
      %p96 = scmp.ne.s32.totalorder %s88, %s90
      %p97 = scmp.eq.s32.totalorder %s24, 1
      %p98 = por %p96, %p97
      %p99 = scmp.ne.s32.totalorder %s90, %s91
      %p100 = scmp.eq.s32.totalorder %s24, 0
      %p101 = por %p99, %p100
      %p102 = scmp.ne.s32.totalorder %s90, %s91
      %p103 = scmp.eq.s32.totalorder %s25, 1
      %p104 = por %p102, %p103
      %p106 = scmp.ne.s32.totalorder %s91, %s105
      %p107 = scmp.eq.s32.totalorder %s25, 0
      %p108 = por %p106, %p107
      %s110 = sadd.s32 %s109, 1
      %p113 = scmp.eq.s32.totalorder %s19, 1
      %p114 = scmp.ne.s32.totalorder %s109, %s111
      %p115 = scmp.eq.s32.totalorder %s19, 0
      %p116 = por %p114, %p115
      %p117 = scmp.ne.s32.totalorder %s109, %s111
      %p118 = scmp.eq.s32.totalorder %s24, 1
      %p119 = por %p117, %p118
      %p120 = scmp.ne.s32.totalorder %s111, %s112
      %p121 = scmp.eq.s32.totalorder %s24, 0
      %p122 = por %p120, %p121
      %p123 = scmp.ne.s32.totalorder %s111, %s112
      %p124 = scmp.eq.s32.totalorder %s25, 1
      %p125 = por %p123, %p124
      %p127 = scmp.ne.s32.totalorder %s112, %s126
      %p128 = scmp.eq.s32.totalorder %s25, 0
      %p129 = por %p127, %p128
      %s131 = sadd.s32 %s130, 1
      %p134 = scmp.eq.s32.totalorder %s19, 1
      %p135 = scmp.ne.s32.totalorder %s130, %s132
      %p136 = scmp.eq.s32.totalorder %s19, 0
      %p137 = por %p135, %p136
      %p138 = scmp.ne.s32.totalorder %s130, %s132
      %p139 = scmp.eq.s32.totalorder %s24, 1
      %p140 = por %p138, %p139
      %p141 = scmp.ne.s32.totalorder %s132, %s133
      %p142 = scmp.eq.s32.totalorder %s24, 0
      %p143 = por %p141, %p142
      %p144 = scmp.ne.s32.totalorder %s132, %s133
      %p145 = scmp.eq.s32.totalorder %s25, 1
      %p146 = por %p144, %p145
      %p148 = scmp.ne.s32.totalorder %s133, %s147
      %p149 = scmp.eq.s32.totalorder %s25, 0
      %p150 = por %p148, %p149
      %s152 = sadd.s32 %s151, 1
      %p155 = scmp.eq.s32.totalorder %s19, 1
      %p156 = scmp.ne.s32.totalorder %s151, %s153
      %p157 = scmp.eq.s32.totalorder %s19, 0
      %p158 = por %p156, %p157
      %p159 = scmp.ne.s32.totalorder %s151, %s153
      %p160 = scmp.eq.s32.totalorder %s24, 1
      %p161 = por %p159, %p160
      %p162 = scmp.ne.s32.totalorder %s153, %s154
      %p163 = scmp.eq.s32.totalorder %s24, 0
      %p164 = por %p162, %p163
      %p165 = scmp.ne.s32.totalorder %s153, %s154
      %p166 = scmp.eq.s32.totalorder %s25, 1
      %p167 = por %p165, %p166
      %p169 = scmp.ne.s32.totalorder %s154, %s168
      %p170 = scmp.eq.s32.totalorder %s25, 0
      %p171 = por %p169, %p170
      %s173 = sadd.s32 %s172, 1
      %p176 = scmp.eq.s32.totalorder %s19, 1
      %p177 = scmp.ne.s32.totalorder %s172, %s174
      %p178 = scmp.eq.s32.totalorder %s19, 0
      %p179 = por %p177, %p178
      %p180 = scmp.ne.s32.totalorder %s172, %s174
      %p181 = scmp.eq.s32.totalorder %s24, 1
      %p182 = por %p180, %p181
      %p183 = scmp.ne.s32.totalorder %s174, %s175
      %p184 = scmp.eq.s32.totalorder %s24, 0
      %p185 = por %p183, %p184
      %p186 = scmp.ne.s32.totalorder %s174, %s175
      %p187 = scmp.eq.s32.totalorder %s25, 1
      %p188 = por %p186, %p187
      %p190 = scmp.ne.s32.totalorder %s175, %s189
      %p191 = scmp.eq.s32.totalorder %s25, 0
      %p192 = por %p190, %p191
      %s194 = sadd.s32 %s193, 1
      %p197 = scmp.eq.s32.totalorder %s19, 1
      %p198 = scmp.ne.s32.totalorder %s193, %s195
      %p199 = scmp.eq.s32.totalorder %s19, 0
      %p200 = por %p198, %p199
      %p201 = scmp.ne.s32.totalorder %s193, %s195
      %p202 = scmp.eq.s32.totalorder %s24, 1
      %p203 = por %p201, %p202
      %p204 = scmp.ne.s32.totalorder %s195, %s196
      %p205 = scmp.eq.s32.totalorder %s24, 0
      %p206 = por %p204, %p205
      %p207 = scmp.ne.s32.totalorder %s195, %s196
      %p208 = scmp.eq.s32.totalorder %s25, 1
      %p209 = por %p207, %p208
      %p211 = scmp.ne.s32.totalorder %s196, %s210
      %p212 = scmp.eq.s32.totalorder %s25, 0
      %p213 = por %p211, %p212
      %s214 = ssub.s32 %s26, %s38
      %s215 = ssub.s32 %s27, %s34
      %s216 = sor.u32 %s214, %s215
      %p217 = scmp.eq.s32.totalorder %s216, 0
      %s219 = sadd.s32 %s218, 1
      %s220 = scalar_select %p217, %s218, %s219
      %p223 = pneg %p217
      %p224 = scmp.eq.s32.totalorder %s19, 1
      %p225 = por %p223, %p224
      %p226 = scmp.ne.s32.totalorder %s218, %s221
      %p227 = scmp.eq.s32.totalorder %s19, 0
      %p228 = por %p226, %p227
      %p229 = scmp.ne.s32.totalorder %s218, %s221
      %p230 = scmp.eq.s32.totalorder %s24, 1
      %p231 = por %p229, %p230
      %p232 = scmp.ne.s32.totalorder %s221, %s222
      %p233 = scmp.eq.s32.totalorder %s24, 0
      %p234 = por %p232, %p233
      %p235 = scmp.ne.s32.totalorder %s221, %s222
      %p236 = scmp.eq.s32.totalorder %s25, 1
      %p237 = por %p235, %p236
      %p239 = scmp.ne.s32.totalorder %s222, %s238
      %p240 = scmp.eq.s32.totalorder %s25, 0
      %p241 = por %p239, %p240
      %p242 = scmp.le.s32.totalorder 1, %s19
      %p243 = scmp.lt.s32.totalorder %s19, 3
      %p244 = pnand %p242, %p243
      %p245 = pneg %p244
      // Predicated region
      $region9: #{pixelwise_linear.1} parent=5 // pred_check
        _
      $region10: #{pixelwise_linear.1} parent=5 // pred_check_branch
        %247 = sbr.rel (%p244) target = $region12
      $region11: #{pixelwise_linear.1} parent=5 // pred_region
        %s248 = ssub.s32 %s19, 1
        // Predicated region
        $region13: #{pixelwise_linear.1} parent=11 // pred_check
          %p249 = pneg %p52
        $region14: #{pixelwise_linear.1} parent=11 // pred_check_branch
          %251 = sbr.rel (%p249) target = $region16
        $region15: #{pixelwise_linear.1} parent=11 // pred_region
          %s253 = ssub.s32 16, 16
          %254 = vsyncadd [#allocation4], %s253
          %s256 = sshll.u32 %s0, 4
          %s257 = int_to_ptr.vmem [resolvable:$true] %s256
          %259 = dma.vmem_to_smem %s257, 16, [#allocation3], [#allocation4]
        $region16: #{pixelwise_linear.1} parent=11 // pred_fallthru
          _
        // Predicated region
        $region17: #{pixelwise_linear.1} parent=11 // pred_check
          %p260 = pneg %p101
        $region18: #{pixelwise_linear.1} parent=11 // pred_check_branch
          %262 = sbr.rel (%p260) target = $region20
        $region19: #{pixelwise_linear.1} parent=11 // pred_region
          %s264 = ssub.s32 128, 128
          %265 = vsyncadd [#allocation6], %s264
          %s267 = sshll.u32 %s2, 4
          %s268 = int_to_ptr.vmem [resolvable:$true] %s267
          %270 = dma.vmem_to_smem %s268, 128, [#allocation5], [#allocation6]
        $region20: #{pixelwise_linear.1} parent=11 // pred_fallthru
          _
        // Predicated region
        $region21: #{pixelwise_linear.1} parent=11 // pred_check
          %p271 = pneg %p122
        $region22: #{pixelwise_linear.1} parent=11 // pred_check_branch
          %273 = sbr.rel (%p271) target = $region24
        $region23: #{pixelwise_linear.1} parent=11 // pred_region
          %s275 = ssub.s32 16, 16
          %276 = vsyncadd [#allocation6], %s275
          %s278 = sshll.u32 %s3, 4
          %s279 = int_to_ptr.vmem [resolvable:$true] %s278
          %281 = dma.vmem_to_smem %s279, 16, [#allocation7], [#allocation6]
        $region24: #{pixelwise_linear.1} parent=11 // pred_fallthru
          _
        // Predicated region
        $region25: #{pixelwise_linear.1} parent=11 // pred_check
          %p282 = pneg %p143
        $region26: #{pixelwise_linear.1} parent=11 // pred_check_branch
          %284 = sbr.rel (%p282) target = $region28
        $region27: #{pixelwise_linear.1} parent=11 // pred_region
          %s286 = ssub.s32 128, 128
          %287 = vsyncadd [#allocation9], %s286
          %s289 = sshll.u32 %s4, 4
          %s290 = int_to_ptr.vmem [resolvable:$true] %s289
          %292 = dma.vmem_to_smem %s290, 128, [#allocation8], [#allocation9]
        $region28: #{pixelwise_linear.1} parent=11 // pred_fallthru
          _
        // Predicated region
        $region29: #{pixelwise_linear.1} parent=11 // pred_check
          %p293 = pneg %p164
        $region30: #{pixelwise_linear.1} parent=11 // pred_check_branch
          %295 = sbr.rel (%p293) target = $region32
        $region31: #{pixelwise_linear.1} parent=11 // pred_region
          %s297 = ssub.s32 16, 16
          %298 = vsyncadd [#allocation9], %s297
          %s300 = sshll.u32 %s5, 4
          %s301 = int_to_ptr.vmem [resolvable:$true] %s300
          %303 = dma.vmem_to_smem %s301, 16, [#allocation10], [#allocation9]
        $region32: #{pixelwise_linear.1} parent=11 // pred_fallthru
          _
        // Predicated region
        $region33: #{pixelwise_linear.1} parent=11 // pred_check
          %p304 = pneg %p185
        $region34: #{pixelwise_linear.1} parent=11 // pred_check_branch
          %306 = sbr.rel (%p304) target = $region36
        $region35: #{pixelwise_linear.1} parent=11 // pred_region
          %s308 = ssub.s32 16, 16
          %309 = vsyncadd [#allocation12], %s308
          %s311 = sshll.u32 %s6, 4
          %s312 = int_to_ptr.vmem [resolvable:$true] %s311
          %314 = dma.vmem_to_smem %s312, 16, [#allocation11], [#allocation12]
        $region36: #{pixelwise_linear.1} parent=11 // pred_fallthru
          _
        // Predicated region
        $region37: #{pixelwise_linear.1} parent=11 // pred_check
          %p315 = pneg %p206
        $region38: #{pixelwise_linear.1} parent=11 // pred_check_branch
          %317 = sbr.rel (%p315) target = $region40
        $region39: #{pixelwise_linear.1} parent=11 // pred_region
          _
        $region40: #{pixelwise_linear.1} parent=11 // pred_fallthru
          _
      $region12: #{pixelwise_linear.1} parent=5 // pred_fallthru
        _
      %p318 = scmp.lt.s32.totalorder %s19, 2
      // Predicated region
      $region41: #{pixelwise_linear.1} parent=5 // pred_check
        %p319 = pneg %p318
      $region42: #{pixelwise_linear.1} parent=5 // pred_check_branch
        %321 = sbr.rel (%p319) target = $region44
      $region43: #{pixelwise_linear.1} parent=5 // pred_region
        // Predicated region
        $region45: #{pixelwise_linear.1} parent=43 // pred_check
          %p322 = pneg %p74
        $region46: #{pixelwise_linear.1} parent=43 // pred_check_branch
          %324 = sbr.rel (%p322) target = $region48
        $region47: #{pixelwise_linear.1} parent=43 // pred_region
          %p325 = scmp.lt.s32.totalorder %s26, 1
          %s326 = scalar_select %p325, %s26, 1
          %p327 = scmp.lt.s32.totalorder %s27, 0
          %s328 = scalar_select %p327, %s27, 0
          %s329 = smul.addr %s326, 4
          %s330 = sadd.s32 %s328, %s329
          %s331 = smul.addr %s330, 2
          %s332 = scalar_lea.vmem %s1, %s331
        $region48: #{pixelwise_linear.1} parent=43 // pred_fallthru
          _
      $region44: #{pixelwise_linear.1} parent=5 // pred_fallthru
        _
      %p333 = scmp.le.s32.totalorder 1, %s19
      %p334 = scmp.lt.s32.totalorder %s19, 3
      %p335 = pnand %p333, %p334
      %p336 = pneg %p335
      // Predicated region
      $region49: #{pixelwise_linear.1} parent=5 // pred_check
        _
      $region50: #{pixelwise_linear.1} parent=5 // pred_check_branch
        %338 = sbr.rel (%p335) target = $region52
      $region51: #{pixelwise_linear.1} parent=5 // pred_region
        %s339 = ssub.s32 %s19, 1
        // Predicated region
        $region53: #{pixelwise_linear.1} parent=51 // pred_check
          %p340 = pneg %p52
        $region54: #{pixelwise_linear.1} parent=51 // pred_check_branch
          %342 = sbr.rel (%p340) target = $region56
        $region55: #{pixelwise_linear.1} parent=51 // pred_region
          %343 = dma.done [#allocation4], 16
        $region56: #{pixelwise_linear.1} parent=51 // pred_fallthru
          _
        // Predicated region
        $region57: #{pixelwise_linear.1} parent=51 // pred_check
          %p344 = pneg %p101
        $region58: #{pixelwise_linear.1} parent=51 // pred_check_branch
          %346 = sbr.rel (%p344) target = $region60
        $region59: #{pixelwise_linear.1} parent=51 // pred_region
          %347 = dma.done [#allocation6], 128
        $region60: #{pixelwise_linear.1} parent=51 // pred_fallthru
          _
        // Predicated region
        $region61: #{pixelwise_linear.1} parent=51 // pred_check
          %p348 = pneg %p122
        $region62: #{pixelwise_linear.1} parent=51 // pred_check_branch
          %350 = sbr.rel (%p348) target = $region64
        $region63: #{pixelwise_linear.1} parent=51 // pred_region
          %351 = dma.done [#allocation6], 16
        $region64: #{pixelwise_linear.1} parent=51 // pred_fallthru
          _
        // Predicated region
        $region65: #{pixelwise_linear.1} parent=51 // pred_check
          %p352 = pneg %p143
        $region66: #{pixelwise_linear.1} parent=51 // pred_check_branch
          %354 = sbr.rel (%p352) target = $region68
        $region67: #{pixelwise_linear.1} parent=51 // pred_region
          %355 = dma.done [#allocation9], 128
        $region68: #{pixelwise_linear.1} parent=51 // pred_fallthru
          _
        // Predicated region
        $region69: #{pixelwise_linear.1} parent=51 // pred_check
          %p356 = pneg %p164
        $region70: #{pixelwise_linear.1} parent=51 // pred_check_branch
          %358 = sbr.rel (%p356) target = $region72
        $region71: #{pixelwise_linear.1} parent=51 // pred_region
          %359 = dma.done [#allocation9], 16
        $region72: #{pixelwise_linear.1} parent=51 // pred_fallthru
          _
        // Predicated region
        $region73: #{pixelwise_linear.1} parent=51 // pred_check
          %p360 = pneg %p185
        $region74: #{pixelwise_linear.1} parent=51 // pred_check_branch
          %362 = sbr.rel (%p360) target = $region76
        $region75: #{pixelwise_linear.1} parent=51 // pred_region
          %363 = dma.done [#allocation12], 16
        $region76: #{pixelwise_linear.1} parent=51 // pred_fallthru
          _
        %364 = sfence
        %p365 = pneg %p52
        %p366 = pneg %p49
        %p367 = scmp.lt.s32.totalorder %s28, 1
        %s368 = scalar_select %p367, %s28, 1
        %p369 = scmp.lt.s32.totalorder %s29, 0
        %s370 = scalar_select %p369, %s29, 0
        %s371 = smul.addr %s368, 4
        %s372 = sadd.s32 %s370, %s371
        %s373 = smul.addr %s372, 2
        %s374 = scalar_lea.vmem %s1, %s373
        %p375 = pneg %p80
        %p376 = pneg %p77
        %p377 = pneg %p101
        %p378 = pneg %p98
        %p379 = pneg %p122
        %p380 = pneg %p119
        %p381 = pneg %p143
        %p382 = pneg %p140
        %p383 = pneg %p164
        %p384 = pneg %p161
        %p385 = pneg %p185
        %p386 = pneg %p182
        %p387 = pneg %p206
        %p388 = pneg %p203
        %p389 = pneg %p234
        %p390 = pneg %p231
        %p391 = scmp.lt.s32.totalorder %s28, 1
        %s392 = scalar_select %p391, %s28, 1
        %p393 = scmp.lt.s32.totalorder %s29, 0
        %s394 = scalar_select %p393, %s29, 0
        %s395 = sadd.s32 %s394, %s392
        %s396 = smul.addr %s395, 2
        %s397 = scalar_lea.vmem %s8, %s396
        %p398 = scmp.lt.s32.totalorder %s28, 1
        %s399 = scalar_select %p398, %s28, 1
        %p400 = scmp.lt.s32.totalorder %s29, 0
        %s401 = scalar_select %p400, %s29, 0
        %s402 = smul.addr %s399, 4
        %s403 = sadd.s32 %s401, %s402
        %s404 = smul.addr %s403, 2
        %s405 = scalar_lea.vmem %s1, %s404
        %p406 = scmp.lt.s32.totalorder %s28, 1
        %s407 = scalar_select %p406, %s28, 1
        %p408 = scmp.lt.s32.totalorder %s29, 0
        %s409 = scalar_select %p408, %s29, 0
        %s410 = sadd.s32 %s409, %s407
        %s411 = smul.addr %s410, 2
        %s412 = scalar_lea.vmem %s8, %s411
        %v413 = vld [vmem:[%s405] sm:$0x3]
        %s414 = scalar_lea.vmem %s405, 2
        %v415 = vld [vmem:[%s414] sm:$0x3]
        %s416 = scalar_lea.vmem %s405, 4
        %v417 = vld [vmem:[%s416] sm:$0x3]
        %s418 = scalar_lea.vmem %s405, 6
        %v419 = vld [vmem:[%s418] sm:$0x3]
        %s420 = sld [smem:[#allocation3]]
        %s421 = sld [smem:[#allocation5]]
        %v422 = vstv %s421
        %v423 = vmul.f32 %v413, %v422
        %s424 = sld [smem:[#allocation7]]
        %v425 = vstv %s424
        %v426 = vadd.f32 %v423, %v425
        %s427 = sld [smem:[#allocation5 + $0x1]]
        %v428 = vstv %s427
        %v429 = vmul.f32 %v415, %v428
        %v430 = vadd.f32 %v426, %v429
        %s431 = sld [smem:[#allocation5 + $0x2]]
        %v432 = vstv %s431
        %v433 = vmul.f32 %v417, %v432
        %v434 = vadd.f32 %v430, %v433
        %s435 = sld [smem:[#allocation5 + $0x3]]
        %v436 = vstv %s435
        %v437 = vmul.f32 %v419, %v436
        %v438 = vadd.f32 %v434, %v437
        %vm439 = vcmp.gt.f32.partialorder %v438, 0.0
        %v440 = vstv %s420
        %v441 = vmul.f32 %v440, %v438
        %v442 = vsel %vm439, %v438, %v441
        %s443 = sld [smem:[#allocation5 + $0x80]]
        %v444 = vstv %s443
        %v445 = vmul.f32 %v413, %v444
        %s446 = sld [smem:[#allocation7 + $0x1]]
        %v447 = vstv %s446
        %v448 = vadd.f32 %v445, %v447
        %s449 = sld [smem:[#allocation5 + $0x81]]
        %v450 = vstv %s449
        %v451 = vmul.f32 %v415, %v450
        %v452 = vadd.f32 %v448, %v451
        %s453 = sld [smem:[#allocation5 + $0x82]]
        %v454 = vstv %s453
        %v455 = vmul.f32 %v417, %v454
        %v456 = vadd.f32 %v452, %v455
        %s457 = sld [smem:[#allocation5 + $0x83]]
        %v458 = vstv %s457
        %v459 = vmul.f32 %v419, %v458
        %v460 = vadd.f32 %v456, %v459
        %vm461 = vcmp.gt.f32.partialorder %v460, 0.0
        %v462 = vmul.f32 %v440, %v460
        %v463 = vsel %vm461, %v460, %v462
        %s464 = sld [smem:[#allocation5 + $0x100]]
        %v465 = vstv %s464
        %v466 = vmul.f32 %v413, %v465
        %s467 = sld [smem:[#allocation7 + $0x2]]
        %v468 = vstv %s467
        %v469 = vadd.f32 %v466, %v468
        %s470 = sld [smem:[#allocation5 + $0x101]]
        %v471 = vstv %s470
        %v472 = vmul.f32 %v415, %v471
        %v473 = vadd.f32 %v469, %v472
        %s474 = sld [smem:[#allocation5 + $0x102]]
        %v475 = vstv %s474
        %v476 = vmul.f32 %v417, %v475
        %v477 = vadd.f32 %v473, %v476
        %s478 = sld [smem:[#allocation5 + $0x103]]
        %v479 = vstv %s478
        %v480 = vmul.f32 %v419, %v479
        %v481 = vadd.f32 %v477, %v480
        %vm482 = vcmp.gt.f32.partialorder %v481, 0.0
        %v483 = vmul.f32 %v440, %v481
        %v484 = vsel %vm482, %v481, %v483
        %s485 = sld [smem:[#allocation5 + $0x180]]
        %v486 = vstv %s485
        %v487 = vmul.f32 %v413, %v486
        %s488 = sld [smem:[#allocation7 + $0x3]]
        %v489 = vstv %s488
        %v490 = vadd.f32 %v487, %v489
        %s491 = sld [smem:[#allocation5 + $0x181]]
        %v492 = vstv %s491
        %v493 = vmul.f32 %v415, %v492
        %v494 = vadd.f32 %v490, %v493
        %s495 = sld [smem:[#allocation5 + $0x182]]
        %v496 = vstv %s495
        %v497 = vmul.f32 %v417, %v496
        %v498 = vadd.f32 %v494, %v497
        %s499 = sld [smem:[#allocation5 + $0x183]]
        %v500 = vstv %s499
        %v501 = vmul.f32 %v419, %v500
        %v502 = vadd.f32 %v498, %v501
        %vm503 = vcmp.gt.f32.partialorder %v502, 0.0
        %v504 = vmul.f32 %v440, %v502
        %v505 = vsel %vm503, %v502, %v504
        %s506 = sld [smem:[#allocation5 + $0x200]]
        %v507 = vstv %s506
        %v508 = vmul.f32 %v413, %v507
        %s509 = sld [smem:[#allocation7 + $0x4]]
        %v510 = vstv %s509
        %v511 = vadd.f32 %v508, %v510
        %s512 = sld [smem:[#allocation5 + $0x201]]
        %v513 = vstv %s512
        %v514 = vmul.f32 %v415, %v513
        %v515 = vadd.f32 %v511, %v514
        %s516 = sld [smem:[#allocation5 + $0x202]]
        %v517 = vstv %s516
        %v518 = vmul.f32 %v417, %v517
        %v519 = vadd.f32 %v515, %v518
        %s520 = sld [smem:[#allocation5 + $0x203]]
        %v521 = vstv %s520
        %v522 = vmul.f32 %v419, %v521
        %v523 = vadd.f32 %v519, %v522
        %vm524 = vcmp.gt.f32.partialorder %v523, 0.0
        %v525 = vmul.f32 %v440, %v523
        %v526 = vsel %vm524, %v523, %v525
        %s527 = sld [smem:[#allocation5 + $0x280]]
        %v528 = vstv %s527
        %v529 = vmul.f32 %v413, %v528
        %s530 = sld [smem:[#allocation7 + $0x5]]
        %v531 = vstv %s530
        %v532 = vadd.f32 %v529, %v531
        %s533 = sld [smem:[#allocation5 + $0x281]]
        %v534 = vstv %s533
        %v535 = vmul.f32 %v415, %v534
        %v536 = vadd.f32 %v532, %v535
        %s537 = sld [smem:[#allocation5 + $0x282]]
        %v538 = vstv %s537
        %v539 = vmul.f32 %v417, %v538
        %v540 = vadd.f32 %v536, %v539
        %s541 = sld [smem:[#allocation5 + $0x283]]
        %v542 = vstv %s541
        %v543 = vmul.f32 %v419, %v542
        %v544 = vadd.f32 %v540, %v543
        %vm545 = vcmp.gt.f32.partialorder %v544, 0.0
        %v546 = vmul.f32 %v440, %v544
        %v547 = vsel %vm545, %v544, %v546
        %s548 = sld [smem:[#allocation5 + $0x300]]
        %v549 = vstv %s548
        %v550 = vmul.f32 %v413, %v549
        %s551 = sld [smem:[#allocation7 + $0x6]]
        %v552 = vstv %s551
        %v553 = vadd.f32 %v550, %v552
        %s554 = sld [smem:[#allocation5 + $0x301]]
        %v555 = vstv %s554
        %v556 = vmul.f32 %v415, %v555
        %v557 = vadd.f32 %v553, %v556
        %s558 = sld [smem:[#allocation5 + $0x302]]
        %v559 = vstv %s558
        %v560 = vmul.f32 %v417, %v559
        %v561 = vadd.f32 %v557, %v560
        %s562 = sld [smem:[#allocation5 + $0x303]]
        %v563 = vstv %s562
        %v564 = vmul.f32 %v419, %v563
        %v565 = vadd.f32 %v561, %v564
        %vm566 = vcmp.gt.f32.partialorder %v565, 0.0
        %v567 = vmul.f32 %v440, %v565
        %v568 = vsel %vm566, %v565, %v567
        %s569 = sld [smem:[#allocation5 + $0x380]]
        %v570 = vstv %s569
        %v571 = vmul.f32 %v413, %v570
        %s572 = sld [smem:[#allocation7 + $0x7]]
        %v573 = vstv %s572
        %v574 = vadd.f32 %v571, %v573
        %s575 = sld [smem:[#allocation5 + $0x381]]
        %v576 = vstv %s575
        %v577 = vmul.f32 %v415, %v576
        %v578 = vadd.f32 %v574, %v577
        %s579 = sld [smem:[#allocation5 + $0x382]]
        %v580 = vstv %s579
        %v581 = vmul.f32 %v417, %v580
        %v582 = vadd.f32 %v578, %v581
        %s583 = sld [smem:[#allocation5 + $0x383]]
        %v584 = vstv %s583
        %v585 = vmul.f32 %v419, %v584
        %v586 = vadd.f32 %v582, %v585
        %vm587 = vcmp.gt.f32.partialorder %v586, 0.0
        %v588 = vmul.f32 %v440, %v586
        %v589 = vsel %vm587, %v586, %v588
        %s590 = sld [smem:[#allocation3 + $0x1]]
        %s591 = sld [smem:[#allocation8]]
        %v592 = vstv %s591
        %v593 = vmul.f32 %v442, %v592
        %s594 = sld [smem:[#allocation10]]
        %v595 = vstv %s594
        %v596 = vadd.f32 %v593, %v595
        %s597 = sld [smem:[#allocation8 + $0x1]]
        %v598 = vstv %s597
        %v599 = vmul.f32 %v463, %v598
        %v600 = vadd.f32 %v596, %v599
        %s601 = sld [smem:[#allocation8 + $0x2]]
        %v602 = vstv %s601
        %v603 = vmul.f32 %v484, %v602
        %v604 = vadd.f32 %v600, %v603
        %s605 = sld [smem:[#allocation8 + $0x3]]
        %v606 = vstv %s605
        %v607 = vmul.f32 %v505, %v606
        %v608 = vadd.f32 %v604, %v607
        %s609 = sld [smem:[#allocation8 + $0x4]]
        %v610 = vstv %s609
        %v611 = vmul.f32 %v526, %v610
        %v612 = vadd.f32 %v608, %v611
        %s613 = sld [smem:[#allocation8 + $0x5]]
        %v614 = vstv %s613
        %v615 = vmul.f32 %v547, %v614
        %v616 = vadd.f32 %v612, %v615
        %s617 = sld [smem:[#allocation8 + $0x6]]
        %v618 = vstv %s617
        %v619 = vmul.f32 %v568, %v618
        %v620 = vadd.f32 %v616, %v619
        %s621 = sld [smem:[#allocation8 + $0x7]]
        %v622 = vstv %s621
        %v623 = vmul.f32 %v589, %v622
        %v624 = vadd.f32 %v620, %v623
        %vm625 = vcmp.gt.f32.partialorder %v624, 0.0
        %v626 = vstv %s590
        %v627 = vmul.f32 %v626, %v624
        %v628 = vsel %vm625, %v624, %v627
        %s629 = sld [smem:[#allocation8 + $0x80]]
        %v630 = vstv %s629
        %v631 = vmul.f32 %v442, %v630
        %s632 = sld [smem:[#allocation10 + $0x1]]
        %v633 = vstv %s632
        %v634 = vadd.f32 %v631, %v633
        %s635 = sld [smem:[#allocation8 + $0x81]]
        %v636 = vstv %s635
        %v637 = vmul.f32 %v463, %v636
        %v638 = vadd.f32 %v634, %v637
        %s639 = sld [smem:[#allocation8 + $0x82]]
        %v640 = vstv %s639
        %v641 = vmul.f32 %v484, %v640
        %v642 = vadd.f32 %v638, %v641
        %s643 = sld [smem:[#allocation8 + $0x83]]
        %v644 = vstv %s643
        %v645 = vmul.f32 %v505, %v644
        %v646 = vadd.f32 %v642, %v645
        %s647 = sld [smem:[#allocation8 + $0x84]]
        %v648 = vstv %s647
        %v649 = vmul.f32 %v526, %v648
        %v650 = vadd.f32 %v646, %v649
        %s651 = sld [smem:[#allocation8 + $0x85]]
        %v652 = vstv %s651
        %v653 = vmul.f32 %v547, %v652
        %v654 = vadd.f32 %v650, %v653
        %s655 = sld [smem:[#allocation8 + $0x86]]
        %v656 = vstv %s655
        %v657 = vmul.f32 %v568, %v656
        %v658 = vadd.f32 %v654, %v657
        %s659 = sld [smem:[#allocation8 + $0x87]]
        %v660 = vstv %s659
        %v661 = vmul.f32 %v589, %v660
        %v662 = vadd.f32 %v658, %v661
        %vm663 = vcmp.gt.f32.partialorder %v662, 0.0
        %v664 = vmul.f32 %v626, %v662
        %v665 = vsel %vm663, %v662, %v664
        %s666 = sld [smem:[#allocation8 + $0x100]]
        %v667 = vstv %s666
        %v668 = vmul.f32 %v442, %v667
        %s669 = sld [smem:[#allocation10 + $0x2]]
        %v670 = vstv %s669
        %v671 = vadd.f32 %v668, %v670
        %s672 = sld [smem:[#allocation8 + $0x101]]
        %v673 = vstv %s672
        %v674 = vmul.f32 %v463, %v673
        %v675 = vadd.f32 %v671, %v674
        %s676 = sld [smem:[#allocation8 + $0x102]]
        %v677 = vstv %s676
        %v678 = vmul.f32 %v484, %v677
        %v679 = vadd.f32 %v675, %v678
        %s680 = sld [smem:[#allocation8 + $0x103]]
        %v681 = vstv %s680
        %v682 = vmul.f32 %v505, %v681
        %v683 = vadd.f32 %v679, %v682
        %s684 = sld [smem:[#allocation8 + $0x104]]
        %v685 = vstv %s684
        %v686 = vmul.f32 %v526, %v685
        %v687 = vadd.f32 %v683, %v686
        %s688 = sld [smem:[#allocation8 + $0x105]]
        %v689 = vstv %s688
        %v690 = vmul.f32 %v547, %v689
        %v691 = vadd.f32 %v687, %v690
        %s692 = sld [smem:[#allocation8 + $0x106]]
        %v693 = vstv %s692
        %v694 = vmul.f32 %v568, %v693
        %v695 = vadd.f32 %v691, %v694
        %s696 = sld [smem:[#allocation8 + $0x107]]
        %v697 = vstv %s696
        %v698 = vmul.f32 %v589, %v697
        %v699 = vadd.f32 %v695, %v698
        %vm700 = vcmp.gt.f32.partialorder %v699, 0.0
        %v701 = vmul.f32 %v626, %v699
        %v702 = vsel %vm700, %v699, %v701
        %s703 = sld [smem:[#allocation8 + $0x180]]
        %v704 = vstv %s703
        %v705 = vmul.f32 %v442, %v704
        %s706 = sld [smem:[#allocation10 + $0x3]]
        %v707 = vstv %s706
        %v708 = vadd.f32 %v705, %v707
        %s709 = sld [smem:[#allocation8 + $0x181]]
        %v710 = vstv %s709
        %v711 = vmul.f32 %v463, %v710
        %v712 = vadd.f32 %v708, %v711
        %s713 = sld [smem:[#allocation8 + $0x182]]
        %v714 = vstv %s713
        %v715 = vmul.f32 %v484, %v714
        %v716 = vadd.f32 %v712, %v715
        %s717 = sld [smem:[#allocation8 + $0x183]]
        %v718 = vstv %s717
        %v719 = vmul.f32 %v505, %v718
        %v720 = vadd.f32 %v716, %v719
        %s721 = sld [smem:[#allocation8 + $0x184]]
        %v722 = vstv %s721
        %v723 = vmul.f32 %v526, %v722
        %v724 = vadd.f32 %v720, %v723
        %s725 = sld [smem:[#allocation8 + $0x185]]
        %v726 = vstv %s725
        %v727 = vmul.f32 %v547, %v726
        %v728 = vadd.f32 %v724, %v727
        %s729 = sld [smem:[#allocation8 + $0x186]]
        %v730 = vstv %s729
        %v731 = vmul.f32 %v568, %v730
        %v732 = vadd.f32 %v728, %v731
        %s733 = sld [smem:[#allocation8 + $0x187]]
        %v734 = vstv %s733
        %v735 = vmul.f32 %v589, %v734
        %v736 = vadd.f32 %v732, %v735
        %vm737 = vcmp.gt.f32.partialorder %v736, 0.0
        %v738 = vmul.f32 %v626, %v736
        %v739 = vsel %vm737, %v736, %v738
        %s740 = sld [smem:[#allocation8 + $0x200]]
        %v741 = vstv %s740
        %v742 = vmul.f32 %v442, %v741
        %s743 = sld [smem:[#allocation10 + $0x4]]
        %v744 = vstv %s743
        %v745 = vadd.f32 %v742, %v744
        %s746 = sld [smem:[#allocation8 + $0x201]]
        %v747 = vstv %s746
        %v748 = vmul.f32 %v463, %v747
        %v749 = vadd.f32 %v745, %v748
        %s750 = sld [smem:[#allocation8 + $0x202]]
        %v751 = vstv %s750
        %v752 = vmul.f32 %v484, %v751
        %v753 = vadd.f32 %v749, %v752
        %s754 = sld [smem:[#allocation8 + $0x203]]
        %v755 = vstv %s754
        %v756 = vmul.f32 %v505, %v755
        %v757 = vadd.f32 %v753, %v756
        %s758 = sld [smem:[#allocation8 + $0x204]]
        %v759 = vstv %s758
        %v760 = vmul.f32 %v526, %v759
        %v761 = vadd.f32 %v757, %v760
        %s762 = sld [smem:[#allocation8 + $0x205]]
        %v763 = vstv %s762
        %v764 = vmul.f32 %v547, %v763
        %v765 = vadd.f32 %v761, %v764
        %s766 = sld [smem:[#allocation8 + $0x206]]
        %v767 = vstv %s766
        %v768 = vmul.f32 %v568, %v767
        %v769 = vadd.f32 %v765, %v768
        %s770 = sld [smem:[#allocation8 + $0x207]]
        %v771 = vstv %s770
        %v772 = vmul.f32 %v589, %v771
        %v773 = vadd.f32 %v769, %v772
        %vm774 = vcmp.gt.f32.partialorder %v773, 0.0
        %v775 = vmul.f32 %v626, %v773
        %v776 = vsel %vm774, %v773, %v775
        %s777 = sld [smem:[#allocation8 + $0x280]]
        %v778 = vstv %s777
        %v779 = vmul.f32 %v442, %v778
        %s780 = sld [smem:[#allocation10 + $0x5]]
        %v781 = vstv %s780
        %v782 = vadd.f32 %v779, %v781
        %s783 = sld [smem:[#allocation8 + $0x281]]
        %v784 = vstv %s783
        %v785 = vmul.f32 %v463, %v784
        %v786 = vadd.f32 %v782, %v785
        %s787 = sld [smem:[#allocation8 + $0x282]]
        %v788 = vstv %s787
        %v789 = vmul.f32 %v484, %v788
        %v790 = vadd.f32 %v786, %v789
        %s791 = sld [smem:[#allocation8 + $0x283]]
        %v792 = vstv %s791
        %v793 = vmul.f32 %v505, %v792
        %v794 = vadd.f32 %v790, %v793
        %s795 = sld [smem:[#allocation8 + $0x284]]
        %v796 = vstv %s795
        %v797 = vmul.f32 %v526, %v796
        %v798 = vadd.f32 %v794, %v797
        %s799 = sld [smem:[#allocation8 + $0x285]]
        %v800 = vstv %s799
        %v801 = vmul.f32 %v547, %v800
        %v802 = vadd.f32 %v798, %v801
        %s803 = sld [smem:[#allocation8 + $0x286]]
        %v804 = vstv %s803
        %v805 = vmul.f32 %v568, %v804
        %v806 = vadd.f32 %v802, %v805
        %s807 = sld [smem:[#allocation8 + $0x287]]
        %v808 = vstv %s807
        %v809 = vmul.f32 %v589, %v808
        %v810 = vadd.f32 %v806, %v809
        %vm811 = vcmp.gt.f32.partialorder %v810, 0.0
        %v812 = vmul.f32 %v626, %v810
        %v813 = vsel %vm811, %v810, %v812
        %s814 = sld [smem:[#allocation8 + $0x300]]
        %v815 = vstv %s814
        %v816 = vmul.f32 %v442, %v815
        %s817 = sld [smem:[#allocation10 + $0x6]]
        %v818 = vstv %s817
        %v819 = vadd.f32 %v816, %v818
        %s820 = sld [smem:[#allocation8 + $0x301]]
        %v821 = vstv %s820
        %v822 = vmul.f32 %v463, %v821
        %v823 = vadd.f32 %v819, %v822
        %s824 = sld [smem:[#allocation8 + $0x302]]
        %v825 = vstv %s824
        %v826 = vmul.f32 %v484, %v825
        %v827 = vadd.f32 %v823, %v826
        %s828 = sld [smem:[#allocation8 + $0x303]]
        %v829 = vstv %s828
        %v830 = vmul.f32 %v505, %v829
        %v831 = vadd.f32 %v827, %v830
        %s832 = sld [smem:[#allocation8 + $0x304]]
        %v833 = vstv %s832
        %v834 = vmul.f32 %v526, %v833
        %v835 = vadd.f32 %v831, %v834
        %s836 = sld [smem:[#allocation8 + $0x305]]
        %v837 = vstv %s836
        %v838 = vmul.f32 %v547, %v837
        %v839 = vadd.f32 %v835, %v838
        %s840 = sld [smem:[#allocation8 + $0x306]]
        %v841 = vstv %s840
        %v842 = vmul.f32 %v568, %v841
        %v843 = vadd.f32 %v839, %v842
        %s844 = sld [smem:[#allocation8 + $0x307]]
        %v845 = vstv %s844
        %v846 = vmul.f32 %v589, %v845
        %v847 = vadd.f32 %v843, %v846
        %vm848 = vcmp.gt.f32.partialorder %v847, 0.0
        %v849 = vmul.f32 %v626, %v847
        %v850 = vsel %vm848, %v847, %v849
        %s851 = sld [smem:[#allocation8 + $0x380]]
        %v852 = vstv %s851
        %v853 = vmul.f32 %v442, %v852
        %s854 = sld [smem:[#allocation10 + $0x7]]
        %v855 = vstv %s854
        %v856 = vadd.f32 %v853, %v855
        %s857 = sld [smem:[#allocation8 + $0x381]]
        %v858 = vstv %s857
        %v859 = vmul.f32 %v463, %v858
        %v860 = vadd.f32 %v856, %v859
        %s861 = sld [smem:[#allocation8 + $0x382]]
        %v862 = vstv %s861
        %v863 = vmul.f32 %v484, %v862
        %v864 = vadd.f32 %v860, %v863
        %s865 = sld [smem:[#allocation8 + $0x383]]
        %v866 = vstv %s865
        %v867 = vmul.f32 %v505, %v866
        %v868 = vadd.f32 %v864, %v867
        %s869 = sld [smem:[#allocation8 + $0x384]]
        %v870 = vstv %s869
        %v871 = vmul.f32 %v526, %v870
        %v872 = vadd.f32 %v868, %v871
        %s873 = sld [smem:[#allocation8 + $0x385]]
        %v874 = vstv %s873
        %v875 = vmul.f32 %v547, %v874
        %v876 = vadd.f32 %v872, %v875
        %s877 = sld [smem:[#allocation8 + $0x386]]
        %v878 = vstv %s877
        %v879 = vmul.f32 %v568, %v878
        %v880 = vadd.f32 %v876, %v879
        %s881 = sld [smem:[#allocation8 + $0x387]]
        %v882 = vstv %s881
        %v883 = vmul.f32 %v589, %v882
        %v884 = vadd.f32 %v880, %v883
        %vm885 = vcmp.gt.f32.partialorder %v884, 0.0
        %v886 = vmul.f32 %v626, %v884
        %v887 = vsel %vm885, %v884, %v886
        %s888 = sld [smem:[#allocation3 + $0x2]]
        %s889 = sld [smem:[#allocation11]]
        %v890 = vstv %s889
        %v891 = vmul.f32 %v628, %v890
        %s892 = sld [smem:[#allocation2]]
        %v893 = vstv %s892
        %v894 = vadd.f32 %v891, %v893
        %s895 = sld [smem:[#allocation11 + $0x1]]
        %v896 = vstv %s895
        %v897 = vmul.f32 %v665, %v896
        %v898 = vadd.f32 %v894, %v897
        %s899 = sld [smem:[#allocation11 + $0x2]]
        %v900 = vstv %s899
        %v901 = vmul.f32 %v702, %v900
        %v902 = vadd.f32 %v898, %v901
        %s903 = sld [smem:[#allocation11 + $0x3]]
        %v904 = vstv %s903
        %v905 = vmul.f32 %v739, %v904
        %v906 = vadd.f32 %v902, %v905
        %s907 = sld [smem:[#allocation11 + $0x4]]
        %v908 = vstv %s907
        %v909 = vmul.f32 %v776, %v908
        %v910 = vadd.f32 %v906, %v909
        %s911 = sld [smem:[#allocation11 + $0x5]]
        %v912 = vstv %s911
        %v913 = vmul.f32 %v813, %v912
        %v914 = vadd.f32 %v910, %v913
        %s915 = sld [smem:[#allocation11 + $0x6]]
        %v916 = vstv %s915
        %v917 = vmul.f32 %v850, %v916
        %v918 = vadd.f32 %v914, %v917
        %s919 = sld [smem:[#allocation11 + $0x7]]
        %v920 = vstv %s919
        %v921 = vmul.f32 %v887, %v920
        %v922 = vadd.f32 %v918, %v921
        %vm923 = vcmp.gt.f32.partialorder %v922, 0.0
        %v924 = vstv %s888
        %v925 = vmul.f32 %v924, %v922
        %v926 = vsel %vm923, %v922, %v925
        %927 = vst [vmem:[%s412] sm:$0x3] %v926
        %p928 = scmp.lt.s32.totalorder %s28, 1
        %s929 = scalar_select %p928, %s28, 1
        %p930 = scmp.lt.s32.totalorder %s29, 0
        %s931 = scalar_select %p930, %s29, 0
        %s932 = sadd.s32 %s931, %s929
        %s933 = smul.addr %s932, 2
        %s934 = scalar_lea.vmem %s8, %s933
        // Predicated region
        $region77: #{pixelwise_linear.1} parent=51 // pred_check
          %p935 = pneg %p231
        $region78: #{pixelwise_linear.1} parent=51 // pred_check_branch
          %937 = sbr.rel (%p935) target = $region80
        $region79: #{pixelwise_linear.1} parent=51 // pred_region
          _
        $region80: #{pixelwise_linear.1} parent=51 // pred_fallthru
          _
      $region52: #{pixelwise_linear.1} parent=5 // pred_fallthru
        _
      %p938 = scmp.le.s32.totalorder 2, %s19
      // Predicated region
      $region81: #{pixelwise_linear.1} parent=5 // pred_check
        %p939 = pneg %p938
      $region82: #{pixelwise_linear.1} parent=5 // pred_check_branch
        %941 = sbr.rel (%p939) target = $region84
      $region83: #{pixelwise_linear.1} parent=5 // pred_region
        %s942 = ssub.s32 %s19, 2
        // Predicated region
        $region85: #{pixelwise_linear.1} parent=83 // pred_check
          %p943 = pneg %p237
        $region86: #{pixelwise_linear.1} parent=83 // pred_check_branch
          %945 = sbr.rel (%p943) target = $region88
        $region87: #{pixelwise_linear.1} parent=83 // pred_region
          %p946 = scmp.lt.s32.totalorder %s30, 1
          %s947 = scalar_select %p946, %s30, 1
          %p948 = scmp.lt.s32.totalorder %s31, 0
          %s949 = scalar_select %p948, %s31, 0
          %s950 = sadd.s32 %s949, %s947
          %s951 = smul.addr %s950, 2
          %s952 = scalar_lea.vmem %s8, %s951
        $region88: #{pixelwise_linear.1} parent=83 // pred_fallthru
          _
      $region84: #{pixelwise_linear.1} parent=5 // pred_fallthru
        _
    $region6: #{pixelwise_linear.1} parent=1 // loop_footer
      %s23 = sadd.s32 1, %s19
    $region7: #{pixelwise_linear.1} parent=1 // loop_footer_branch
      %18 = sbr.rel target = $region3
    $region8: #{pixelwise_linear.1} parent=1 // loop_exit
      _
    %953 = vsyncpa [#allocation4], 1
    %s954 = scalar_lea.sflag [#allocation4], 1
    %955 = vsyncpa %s954, 1
    %956 = vsyncpa [#allocation6], 1
    %957 = vsyncpa [#allocation9], 1
    %958 = vsyncpa [#allocation12], 1

</llo_original>
